<compile_context>
chip_gen: v5e
topology: v5e:2x2
jax: 0.10.0
libtpu: 0.0.40
codegen_flags: <defaults>
</compile_context>

<pallas_src>
import functools

import jax
import jax.numpy as jnp
import numpy as np
from jax.experimental import pallas as pl
from jax.experimental.pallas import tpu as pltpu

KSIZE = 25
PAD = 12
HALO = 16            # sublane-aligned halo (>= PAD); OFF = HALO - PAD = 4
EXPANSION = 4
BN_EPS = 1e-5


def _block_kernel(xt_ref, xc_ref, xb_ref, w1_ref, w2_ref, w3_ref,
                  b1_ref, b2_ref, b3_ref, o_ref, *, TL):
    i = pl.program_id(1)
    n_l = pl.num_programs(1)
    planes = w2_ref.shape[2]

    def conv1(xp):
        # 1x1 conv (bn1 scale folded into w1) + bias + relu, f32 accumulation.
        h = jnp.dot(xp, w1_ref[...], preferred_element_type=jnp.float32)
        return jnp.maximum(h + b1_ref[...], 0.0)

    # conv1 per piece, cast to bf16 immediately (cheap, planes-wide pieces).
    # Halo pieces that fall outside the real sequence are zeroed wholesale so
    # they behave exactly like conv2's zero padding (relu(bn1(conv1(0))) != 0).
    # dropout(p=0.2): eval-mode identity.
    h_top = jnp.where(i > 0, conv1(xt_ref[0]), 0.0).astype(jnp.bfloat16)       # (HALO, P)
    h_mid = conv1(xc_ref[0]).astype(jnp.bfloat16)                              # (TL,   P)
    h_bot = jnp.where(i < n_l - 1, conv1(xb_ref[0]), 0.0).astype(jnp.bfloat16)  # (HALO, P)
    h1 = jnp.concatenate([h_top, h_mid, h_bot], axis=0)                        # (TL+2*HALO, P) bf16

    # conv2 (k=25, pad=12, bn2 scale folded): per-tap MXU matmuls, f32 accumulator.
    OFF = HALO - PAD
    acc = jnp.zeros((TL, planes), jnp.float32)
    for k in range(KSIZE):
        acc = acc + jnp.dot(h1[OFF + k:OFF + k + TL, :], w2_ref[k],
                            preferred_element_type=jnp.float32)
    h2 = jnp.maximum(acc + b2_ref[...], 0.0).astype(jnp.bfloat16)              # (TL, P)

    # conv3 (1x1, bn3 scale folded) + bias + identity residual + relu.
    h3 = jnp.dot(h2, w3_ref[...], preferred_element_type=jnp.float32) + b3_ref[...]
    residual = xc_ref[0].astype(jnp.float32)                                   # (TL, Cout)
    o_ref[0] = jnp.maximum(h3 + residual, 0.0).astype(o_ref.dtype)


def basic_block_bottle(x_ncl, params, *, tl=None):
    """x_ncl: (N, C, L) float32, C == EXPANSION * planes (identity residual).

    Returns (N, C, L) in bf16 (MXU-operand / writeback precision).
    """
    B, Cin, L = x_ncl.shape
    planes = params["w1"].shape[0]
    Cout = EXPANSION * planes
    assert Cin == Cout, "identity residual requires inplanes == expansion*planes"

    if tl is None:
        tl = L if L <= 512 else 512
    assert L % tl == 0 and tl % HALO == 0, "tile must divide L and be a multiple of 16"

    # NLC layout, bf16 for the MXU.  No length padding: halos come from
    # clamped neighbour blocks and are masked in-kernel.
    x = jnp.transpose(x_ncl, (0, 2, 1)).astype(jnp.bfloat16)                   # (B, L, Cin)

    def bn_fold(gamma, beta, mean, var):
        scale = gamma / jnp.sqrt(var + BN_EPS)
        return scale, beta - mean * scale

    s1, b1 = bn_fold(*params["bn1"])
    s2, b2 = bn_fold(*params["bn2"])
    s3, b3 = bn_fold(*params["bn3"])

    # Fold BN output-channel scales into the conv weights (f32), then cast bf16.
    w1f = (jnp.transpose(params["w1"][:, :, 0]) * s1[None, :]).astype(jnp.bfloat16)      # (Cin, P)
    w2f = (jnp.transpose(params["w2"], (2, 1, 0)) * s2[None, None, :]).astype(jnp.bfloat16)  # (K, P, P)
    w3f = (jnp.transpose(params["w3"][:, :, 0]) * s3[None, :]).astype(jnp.bfloat16)      # (P, Cout)
    b1 = b1[None, :].astype(jnp.float32)
    b2 = b2[None, :].astype(jnp.float32)
    b3 = b3[None, :].astype(jnp.float32)

    nb16 = L // HALO          # number of 16-row blocks along the length axis
    r = tl // HALO            # 16-row blocks per length tile

    # Per-tile haloed reads of x: previous / current / next blocks, with the
    # halo block indices clamped at the sequence boundaries (masked in-kernel).
    x_prev_spec = pl.BlockSpec((1, HALO, Cin),
                               lambda b, i: (b, jnp.maximum(i * r - 1, 0), 0))
    x_cur_spec = pl.BlockSpec((1, tl, Cin), lambda b, i: (b, i, 0))
    x_next_spec = pl.BlockSpec((1, HALO, Cin),
                               lambda b, i: (b, jnp.minimum((i + 1) * r, nb16 - 1), 0))

    def const2(shape):
        return pl.BlockSpec(shape, lambda b, i: (0, 0))

    def const3(shape):
        return pl.BlockSpec(shape, lambda b, i: (0, 0, 0))

    # VMEM budget from actual buffer sizes (x tiles + out tile double-buffered,
    # weights, biases) with headroom for compiler temporaries; capped at 48 MiB
    # so it also fits v7x's 64 MiB/TC physical VMEM.
    bpe = 2  # bf16
    buf = 2 * bpe * (tl * Cin + 2 * HALO * Cin + tl * Cout)
    wgt = 2 * bpe * (Cin * planes + KSIZE * planes * planes + planes * Cout)
    bias = 2 * 4 * (2 * planes + Cout)
    vmem_limit = int(min(max(8 * (buf + wgt + bias), 16 << 20), 48 << 20))

    kernel = functools.partial(_block_kernel, TL=tl)

    out = pl.pallas_call(
        kernel,
        out_shape=jax.ShapeDtypeStruct((B, L, Cout), jnp.bfloat16),
        grid_spec=pltpu.PrefetchScalarGridSpec(
            num_scalar_prefetch=0,
            grid=(B, L // tl),
            in_specs=[
                x_prev_spec,                              # x halo above tile
                x_cur_spec,                               # x tile (also residual)
                x_next_spec,                              # x halo below tile
                const2((Cin, planes)),                    # w1 (bn1 folded)
                const3((KSIZE, planes, planes)),          # w2 per-tap (bn2 folded)
                const2((planes, Cout)),                   # w3 (bn3 folded)
                const2((1, planes)),                      # bn1 bias
                const2((1, planes)),                      # bn2 bias
                const2((1, Cout)),                        # bn3 bias
            ],
            out_specs=pl.BlockSpec((1, tl, Cout), lambda b, i: (b, i, 0)),
        ),
        compiler_params=pltpu.CompilerParams(
            dimension_semantics=("parallel", "parallel"),
            vmem_limit_bytes=vmem_limit),
    )(x, x, x, w1f, w2f, w3f, b1, b2, b3)

    return jnp.transpose(out, (0, 2, 1))                  # back to NCL (bf16)


def init_params(key, inplanes, planes):
    k1, k2, k3 = jax.random.split(key, 3)
    Cout = EXPANSION * planes
    w1 = jax.random.normal(k1, (planes, inplanes, 1), jnp.float32) * 0.1
    w2 = jax.random.normal(k2, (planes, planes, KSIZE), jnp.float32) * 0.05
    w3 = jax.random.normal(k3, (Cout, planes, 1), jnp.float32) * 0.1

    def bn_params(c, off):
        idx = jnp.arange(c, dtype=jnp.float32)
        gamma = 1.0 + 0.01 * idx
        beta = 0.02 * idx - 0.1
        mean = 0.05 * jnp.sin(idx + off)
        var = 1.0 + 0.1 * jnp.cos(idx + off) ** 2
        return (gamma, beta, mean, var)

    return dict(w1=w1, w2=w2, w3=w3,
                bn1=bn_params(planes, 0.0),
                bn2=bn_params(planes, 1.0),
                bn3=bn_params(Cout, 2.0))


def reference(x_ncl, params):
    """Pure-JAX f32 reference matching PyTorch eval-mode forward (NCL layout)."""
    def conv1d(x, w, pad):
        return jax.lax.conv_general_dilated(
            x, w, window_strides=(1,), padding=[(pad, pad)],
            dimension_numbers=("NCH", "OIH", "NCH"))

    def bn(x, p):
        gamma, beta, mean, var = p
        scale = gamma / jnp.sqrt(var + BN_EPS)
        return x * scale[None, :, None] + (beta - mean * scale)[None, :, None]

    out = jax.nn.relu(bn(conv1d(x_ncl, params["w1"], 0), params["bn1"]))
    out = jax.nn.relu(bn(conv1d(out, params["w2"], PAD), params["bn2"]))
    out = bn(conv1d(out, params["w3"], 0), params["bn3"])
    return jax.nn.relu(out + x_ncl)


if __name__ == "__main__":
    planes = 8
    inplanes = EXPANSION * planes   # 32 -> identity residual is shape-valid
    B, L = 2, 32                    # L tiled as 2 tiles of 16 (grid = 2 x 2)

    key = jax.random.PRNGKey(0)
    kx, kp = jax.random.split(key)
    x = jax.random.normal(kx, (B, inplanes, L), jnp.float32)
    params = init_params(kp, inplanes, planes)

    out = basic_block_bottle(x, params, tl=16)
    out = jax.block_until_ready(out)

    ref = reference(x, params)
    # bf16 MXU operands / bf16 output -> loosened tolerance; accumulation,
    # BN bias adds and the residual add stay f32 in-kernel.
    np.testing.assert_allclose(np.asarray(out).astype(np.float32),
                               np.asarray(ref), rtol=2e-2, atol=2e-2)
    print("KERNEL_OK")
</pallas_src>

<mosaic_0001>
module attributes {stable_mosaic.version = 11 : i64} {
  func.func @_block_kernel(%arg0: i32, %arg1: i32, %arg2: memref<1x16x32xbf16, #tpu.memory_space<vmem>>, %arg3: memref<1x16x32xbf16, #tpu.memory_space<vmem>>, %arg4: memref<1x16x32xbf16, #tpu.memory_space<vmem>>, %arg5: memref<32x8xbf16, #tpu.memory_space<vmem>>, %arg6: memref<25x8x8xbf16, #tpu.memory_space<vmem>>, %arg7: memref<8x32xbf16, #tpu.memory_space<vmem>>, %arg8: memref<1x8xf32, #tpu.memory_space<vmem>>, %arg9: memref<1x8xf32, #tpu.memory_space<vmem>>, %arg10: memref<1x32xf32, #tpu.memory_space<vmem>>, %arg11: memref<1x16x32xbf16, #tpu.memory_space<vmem>>) attributes {dimension_semantics = [#tpu.dimension_semantics<parallel>, #tpu.dimension_semantics<parallel>], iteration_bounds = array<i64: 2, 2>, scalar_prefetch = 0 : i64, scratch_operands = 0 : i64, tpu.core_type = #tpu.core_type<tc>, window_params = [{transform_indices = @transform_0, window_bounds = array<i64: 1, 16, 32>}, {transform_indices = @transform_1, window_bounds = array<i64: 1, 16, 32>}, {transform_indices = @transform_2, window_bounds = array<i64: 1, 16, 32>}, {pipeline_mode = #tpu.pipeline_mode<synchronous>, transform_indices = @transform_3, window_bounds = array<i64: 32, 8>}, {pipeline_mode = #tpu.pipeline_mode<synchronous>, transform_indices = @transform_4, window_bounds = array<i64: 25, 8, 8>}, {pipeline_mode = #tpu.pipeline_mode<synchronous>, transform_indices = @transform_5, window_bounds = array<i64: 8, 32>}, {pipeline_mode = #tpu.pipeline_mode<synchronous>, transform_indices = @transform_6, window_bounds = array<i64: 1, 8>}, {pipeline_mode = #tpu.pipeline_mode<synchronous>, transform_indices = @transform_7, window_bounds = array<i64: 1, 8>}, {pipeline_mode = #tpu.pipeline_mode<synchronous>, transform_indices = @transform_8, window_bounds = array<i64: 1, 32>}, {transform_indices = @transform_9, window_bounds = array<i64: 1, 16, 32>}]} {
    %c0_i32 = arith.constant 0 : i32
    %0 = arith.cmpi sgt, %arg1, %c0_i32 : i32
    %c0 = arith.constant 0 : index
    %c0_0 = arith.constant 0 : index
    %c0_1 = arith.constant 0 : index
    %1 = vector.load %arg2[%c0, %c0_0, %c0_1] : memref<1x16x32xbf16, #tpu.memory_space<vmem>>, vector<1x16x32xbf16>
    %2 = vector.shape_cast %1 : vector<1x16x32xbf16> to vector<16x32xbf16>
    %c0_2 = arith.constant 0 : index
    %c0_3 = arith.constant 0 : index
    %3 = vector.load %arg5[%c0_2, %c0_3] : memref<32x8xbf16, #tpu.memory_space<vmem>>, vector<32x8xbf16>
    %cst = arith.constant dense<0.000000e+00> : vector<16x8xf32>
    %4 = tpu.matmul %2, %3, %cst {dimension_numbers = #tpu.dot_dimension_numbers<[1], [0], [0], [1], [0, 0, 1, 1], [], []>} : vector<16x32xbf16>, vector<32x8xbf16>, vector<16x8xf32> -> vector<16x8xf32>
    %c0_4 = arith.constant 0 : index
    %c0_5 = arith.constant 0 : index
    %5 = vector.load %arg8[%c0_4, %c0_5] : memref<1x8xf32, #tpu.memory_space<vmem>>, vector<1x8xf32>
    %6 = vector.broadcast %5 : vector<1x8xf32> to vector<16x8xf32>
    %7 = arith.addf %4, %6 : vector<16x8xf32>
    %cst_6 = arith.constant 0.000000e+00 : f32
    %8 = vector.broadcast %cst_6 : f32 to vector<16x8xf32>
    %9 = arith.maximumf %7, %8 : vector<16x8xf32>
    %cst_7 = arith.constant 0.000000e+00 : f32
    %10 = vector.broadcast %cst_7 : f32 to vector<16x8xf32>
    %11 = arith.select %0, %9, %10 : vector<16x8xf32>
    %12 = arith.truncf %11 : vector<16x8xf32> to vector<16x8xbf16>
    %c0_8 = arith.constant 0 : index
    %c0_9 = arith.constant 0 : index
    %c0_10 = arith.constant 0 : index
    %13 = vector.load %arg3[%c0_8, %c0_9, %c0_10] : memref<1x16x32xbf16, #tpu.memory_space<vmem>>, vector<1x16x32xbf16>
    %14 = vector.shape_cast %13 : vector<1x16x32xbf16> to vector<16x32xbf16>
    %c0_11 = arith.constant 0 : index
    %c0_12 = arith.constant 0 : index
    %15 = vector.load %arg5[%c0_11, %c0_12] : memref<32x8xbf16, #tpu.memory_space<vmem>>, vector<32x8xbf16>
    %cst_13 = arith.constant dense<0.000000e+00> : vector<16x8xf32>
    %16 = tpu.matmul %14, %15, %cst_13 {dimension_numbers = #tpu.dot_dimension_numbers<[1], [0], [0], [1], [0, 0, 1, 1], [], []>} : vector<16x32xbf16>, vector<32x8xbf16>, vector<16x8xf32> -> vector<16x8xf32>
    %c0_14 = arith.constant 0 : index
    %c0_15 = arith.constant 0 : index
    %17 = vector.load %arg8[%c0_14, %c0_15] : memref<1x8xf32, #tpu.memory_space<vmem>>, vector<1x8xf32>
    %18 = vector.broadcast %17 : vector<1x8xf32> to vector<16x8xf32>
    %19 = arith.addf %16, %18 : vector<16x8xf32>
    %cst_16 = arith.constant 0.000000e+00 : f32
    %20 = vector.broadcast %cst_16 : f32 to vector<16x8xf32>
    %21 = arith.maximumf %19, %20 : vector<16x8xf32>
    %22 = arith.truncf %21 : vector<16x8xf32> to vector<16x8xbf16>
    %c1_i32 = arith.constant 1 : i32
    %23 = arith.cmpi slt, %arg1, %c1_i32 : i32
    %c0_17 = arith.constant 0 : index
    %c0_18 = arith.constant 0 : index
    %c0_19 = arith.constant 0 : index
    %24 = vector.load %arg4[%c0_17, %c0_18, %c0_19] : memref<1x16x32xbf16, #tpu.memory_space<vmem>>, vector<1x16x32xbf16>
    %25 = vector.shape_cast %24 : vector<1x16x32xbf16> to vector<16x32xbf16>
    %c0_20 = arith.constant 0 : index
    %c0_21 = arith.constant 0 : index
    %26 = vector.load %arg5[%c0_20, %c0_21] : memref<32x8xbf16, #tpu.memory_space<vmem>>, vector<32x8xbf16>
    %cst_22 = arith.constant dense<0.000000e+00> : vector<16x8xf32>
    %27 = tpu.matmul %25, %26, %cst_22 {dimension_numbers = #tpu.dot_dimension_numbers<[1], [0], [0], [1], [0, 0, 1, 1], [], []>} : vector<16x32xbf16>, vector<32x8xbf16>, vector<16x8xf32> -> vector<16x8xf32>
    %c0_23 = arith.constant 0 : index
    %c0_24 = arith.constant 0 : index
    %28 = vector.load %arg8[%c0_23, %c0_24] : memref<1x8xf32, #tpu.memory_space<vmem>>, vector<1x8xf32>
    %29 = vector.broadcast %28 : vector<1x8xf32> to vector<16x8xf32>
    %30 = arith.addf %27, %29 : vector<16x8xf32>
    %cst_25 = arith.constant 0.000000e+00 : f32
    %31 = vector.broadcast %cst_25 : f32 to vector<16x8xf32>
    %32 = arith.maximumf %30, %31 : vector<16x8xf32>
    %cst_26 = arith.constant 0.000000e+00 : f32
    %33 = vector.broadcast %cst_26 : f32 to vector<16x8xf32>
    %34 = arith.select %23, %32, %33 : vector<16x8xf32>
    %35 = arith.truncf %34 : vector<16x8xf32> to vector<16x8xbf16>
    %36 = tpu.concatenate %12, %22, %35 in 0 : vector<16x8xbf16>, vector<16x8xbf16>, vector<16x8xbf16> -> vector<48x8xbf16>
    %cst_27 = arith.constant 0.000000e+00 : f32
    %37 = vector.broadcast %cst_27 : f32 to vector<16x8xf32>
    %38 = vector.extract_strided_slice %36 {offsets = [4, 0], sizes = [16, 8], strides = [1, 1]} : vector<48x8xbf16> to vector<16x8xbf16>
    %c0_28 = arith.constant 0 : index
    %c0_29 = arith.constant 0 : index
    %c0_30 = arith.constant 0 : index
    %39 = vector.load %arg6[%c0_28, %c0_29, %c0_30] : memref<25x8x8xbf16, #tpu.memory_space<vmem>>, vector<1x8x8xbf16>
    %40 = vector.shape_cast %39 : vector<1x8x8xbf16> to vector<8x8xbf16>
    %cst_31 = arith.constant dense<0.000000e+00> : vector<16x8xf32>
    %41 = tpu.matmul %38, %40, %cst_31 {dimension_numbers = #tpu.dot_dimension_numbers<[1], [0], [0], [1], [0, 0, 1, 1], [], []>} : vector<16x8xbf16>, vector<8x8xbf16>, vector<16x8xf32> -> vector<16x8xf32>
    %42 = arith.addf %37, %41 : vector<16x8xf32>
    %43 = vector.extract_strided_slice %36 {offsets = [5, 0], sizes = [16, 8], strides = [1, 1]} : vector<48x8xbf16> to vector<16x8xbf16>
    %c1 = arith.constant 1 : index
    %c0_32 = arith.constant 0 : index
    %c0_33 = arith.constant 0 : index
    %44 = vector.load %arg6[%c1, %c0_32, %c0_33] : memref<25x8x8xbf16, #tpu.memory_space<vmem>>, vector<1x8x8xbf16>
    %45 = vector.shape_cast %44 : vector<1x8x8xbf16> to vector<8x8xbf16>
    %cst_34 = arith.constant dense<0.000000e+00> : vector<16x8xf32>
    %46 = tpu.matmul %43, %45, %cst_34 {dimension_numbers = #tpu.dot_dimension_numbers<[1], [0], [0], [1], [0, 0, 1, 1], [], []>} : vector<16x8xbf16>, vector<8x8xbf16>, vector<16x8xf32> -> vector<16x8xf32>
    %47 = arith.addf %42, %46 : vector<16x8xf32>
    %48 = vector.extract_strided_slice %36 {offsets = [6, 0], sizes = [16, 8], strides = [1, 1]} : vector<48x8xbf16> to vector<16x8xbf16>
    %c2 = arith.constant 2 : index
    %c0_35 = arith.constant 0 : index
    %c0_36 = arith.constant 0 : index
    %49 = vector.load %arg6[%c2, %c0_35, %c0_36] : memref<25x8x8xbf16, #tpu.memory_space<vmem>>, vector<1x8x8xbf16>
    %50 = vector.shape_cast %49 : vector<1x8x8xbf16> to vector<8x8xbf16>
    %cst_37 = arith.constant dense<0.000000e+00> : vector<16x8xf32>
    %51 = tpu.matmul %48, %50, %cst_37 {dimension_numbers = #tpu.dot_dimension_numbers<[1], [0], [0], [1], [0, 0, 1, 1], [], []>} : vector<16x8xbf16>, vector<8x8xbf16>, vector<16x8xf32> -> vector<16x8xf32>
    %52 = arith.addf %47, %51 : vector<16x8xf32>
    %53 = vector.extract_strided_slice %36 {offsets = [7, 0], sizes = [16, 8], strides = [1, 1]} : vector<48x8xbf16> to vector<16x8xbf16>
    %c3 = arith.constant 3 : index
    %c0_38 = arith.constant 0 : index
    %c0_39 = arith.constant 0 : index
    %54 = vector.load %arg6[%c3, %c0_38, %c0_39] : memref<25x8x8xbf16, #tpu.memory_space<vmem>>, vector<1x8x8xbf16>
    %55 = vector.shape_cast %54 : vector<1x8x8xbf16> to vector<8x8xbf16>
    %cst_40 = arith.constant dense<0.000000e+00> : vector<16x8xf32>
    %56 = tpu.matmul %53, %55, %cst_40 {dimension_numbers = #tpu.dot_dimension_numbers<[1], [0], [0], [1], [0, 0, 1, 1], [], []>} : vector<16x8xbf16>, vector<8x8xbf16>, vector<16x8xf32> -> vector<16x8xf32>
    %57 = arith.addf %52, %56 : vector<16x8xf32>
    %58 = vector.extract_strided_slice %36 {offsets = [8, 0], sizes = [16, 8], strides = [1, 1]} : vector<48x8xbf16> to vector<16x8xbf16>
    %c4 = arith.constant 4 : index
    %c0_41 = arith.constant 0 : index
    %c0_42 = arith.constant 0 : index
    %59 = vector.load %arg6[%c4, %c0_41, %c0_42] : memref<25x8x8xbf16, #tpu.memory_space<vmem>>, vector<1x8x8xbf16>
    %60 = vector.shape_cast %59 : vector<1x8x8xbf16> to vector<8x8xbf16>
    %cst_43 = arith.constant dense<0.000000e+00> : vector<16x8xf32>
    %61 = tpu.matmul %58, %60, %cst_43 {dimension_numbers = #tpu.dot_dimension_numbers<[1], [0], [0], [1], [0, 0, 1, 1], [], []>} : vector<16x8xbf16>, vector<8x8xbf16>, vector<16x8xf32> -> vector<16x8xf32>
    %62 = arith.addf %57, %61 : vector<16x8xf32>
    %63 = vector.extract_strided_slice %36 {offsets = [9, 0], sizes = [16, 8], strides = [1, 1]} : vector<48x8xbf16> to vector<16x8xbf16>
    %c5 = arith.constant 5 : index
    %c0_44 = arith.constant 0 : index
    %c0_45 = arith.constant 0 : index
    %64 = vector.load %arg6[%c5, %c0_44, %c0_45] : memref<25x8x8xbf16, #tpu.memory_space<vmem>>, vector<1x8x8xbf16>
    %65 = vector.shape_cast %64 : vector<1x8x8xbf16> to vector<8x8xbf16>
    %cst_46 = arith.constant dense<0.000000e+00> : vector<16x8xf32>
    %66 = tpu.matmul %63, %65, %cst_46 {dimension_numbers = #tpu.dot_dimension_numbers<[1], [0], [0], [1], [0, 0, 1, 1], [], []>} : vector<16x8xbf16>, vector<8x8xbf16>, vector<16x8xf32> -> vector<16x8xf32>
    %67 = arith.addf %62, %66 : vector<16x8xf32>
    %68 = vector.extract_strided_slice %36 {offsets = [10, 0], sizes = [16, 8], strides = [1, 1]} : vector<48x8xbf16> to vector<16x8xbf16>
    %c6 = arith.constant 6 : index
    %c0_47 = arith.constant 0 : index
    %c0_48 = arith.constant 0 : index
    %69 = vector.load %arg6[%c6, %c0_47, %c0_48] : memref<25x8x8xbf16, #tpu.memory_space<vmem>>, vector<1x8x8xbf16>
    %70 = vector.shape_cast %69 : vector<1x8x8xbf16> to vector<8x8xbf16>
    %cst_49 = arith.constant dense<0.000000e+00> : vector<16x8xf32>
    %71 = tpu.matmul %68, %70, %cst_49 {dimension_numbers = #tpu.dot_dimension_numbers<[1], [0], [0], [1], [0, 0, 1, 1], [], []>} : vector<16x8xbf16>, vector<8x8xbf16>, vector<16x8xf32> -> vector<16x8xf32>
    %72 = arith.addf %67, %71 : vector<16x8xf32>
    %73 = vector.extract_strided_slice %36 {offsets = [11, 0], sizes = [16, 8], strides = [1, 1]} : vector<48x8xbf16> to vector<16x8xbf16>
    %c7 = arith.constant 7 : index
    %c0_50 = arith.constant 0 : index
    %c0_51 = arith.constant 0 : index
    %74 = vector.load %arg6[%c7, %c0_50, %c0_51] : memref<25x8x8xbf16, #tpu.memory_space<vmem>>, vector<1x8x8xbf16>
    %75 = vector.shape_cast %74 : vector<1x8x8xbf16> to vector<8x8xbf16>
    %cst_52 = arith.constant dense<0.000000e+00> : vector<16x8xf32>
    %76 = tpu.matmul %73, %75, %cst_52 {dimension_numbers = #tpu.dot_dimension_numbers<[1], [0], [0], [1], [0, 0, 1, 1], [], []>} : vector<16x8xbf16>, vector<8x8xbf16>, vector<16x8xf32> -> vector<16x8xf32>
    %77 = arith.addf %72, %76 : vector<16x8xf32>
    %78 = vector.extract_strided_slice %36 {offsets = [12, 0], sizes = [16, 8], strides = [1, 1]} : vector<48x8xbf16> to vector<16x8xbf16>
    %c8 = arith.constant 8 : index
    %c0_53 = arith.constant 0 : index
    %c0_54 = arith.constant 0 : index
    %79 = vector.load %arg6[%c8, %c0_53, %c0_54] : memref<25x8x8xbf16, #tpu.memory_space<vmem>>, vector<1x8x8xbf16>
    %80 = vector.shape_cast %79 : vector<1x8x8xbf16> to vector<8x8xbf16>
    %cst_55 = arith.constant dense<0.000000e+00> : vector<16x8xf32>
    %81 = tpu.matmul %78, %80, %cst_55 {dimension_numbers = #tpu.dot_dimension_numbers<[1], [0], [0], [1], [0, 0, 1, 1], [], []>} : vector<16x8xbf16>, vector<8x8xbf16>, vector<16x8xf32> -> vector<16x8xf32>
    %82 = arith.addf %77, %81 : vector<16x8xf32>
    %83 = vector.extract_strided_slice %36 {offsets = [13, 0], sizes = [16, 8], strides = [1, 1]} : vector<48x8xbf16> to vector<16x8xbf16>
    %c9 = arith.constant 9 : index
    %c0_56 = arith.constant 0 : index
    %c0_57 = arith.constant 0 : index
    %84 = vector.load %arg6[%c9, %c0_56, %c0_57] : memref<25x8x8xbf16, #tpu.memory_space<vmem>>, vector<1x8x8xbf16>
    %85 = vector.shape_cast %84 : vector<1x8x8xbf16> to vector<8x8xbf16>
    %cst_58 = arith.constant dense<0.000000e+00> : vector<16x8xf32>
    %86 = tpu.matmul %83, %85, %cst_58 {dimension_numbers = #tpu.dot_dimension_numbers<[1], [0], [0], [1], [0, 0, 1, 1], [], []>} : vector<16x8xbf16>, vector<8x8xbf16>, vector<16x8xf32> -> vector<16x8xf32>
    %87 = arith.addf %82, %86 : vector<16x8xf32>
    %88 = vector.extract_strided_slice %36 {offsets = [14, 0], sizes = [16, 8], strides = [1, 1]} : vector<48x8xbf16> to vector<16x8xbf16>
    %c10 = arith.constant 10 : index
    %c0_59 = arith.constant 0 : index
    %c0_60 = arith.constant 0 : index
    %89 = vector.load %arg6[%c10, %c0_59, %c0_60] : memref<25x8x8xbf16, #tpu.memory_space<vmem>>, vector<1x8x8xbf16>
    %90 = vector.shape_cast %89 : vector<1x8x8xbf16> to vector<8x8xbf16>
    %cst_61 = arith.constant dense<0.000000e+00> : vector<16x8xf32>
    %91 = tpu.matmul %88, %90, %cst_61 {dimension_numbers = #tpu.dot_dimension_numbers<[1], [0], [0], [1], [0, 0, 1, 1], [], []>} : vector<16x8xbf16>, vector<8x8xbf16>, vector<16x8xf32> -> vector<16x8xf32>
    %92 = arith.addf %87, %91 : vector<16x8xf32>
    %93 = vector.extract_strided_slice %36 {offsets = [15, 0], sizes = [16, 8], strides = [1, 1]} : vector<48x8xbf16> to vector<16x8xbf16>
    %c11 = arith.constant 11 : index
    %c0_62 = arith.constant 0 : index
    %c0_63 = arith.constant 0 : index
    %94 = vector.load %arg6[%c11, %c0_62, %c0_63] : memref<25x8x8xbf16, #tpu.memory_space<vmem>>, vector<1x8x8xbf16>
    %95 = vector.shape_cast %94 : vector<1x8x8xbf16> to vector<8x8xbf16>
    %cst_64 = arith.constant dense<0.000000e+00> : vector<16x8xf32>
    %96 = tpu.matmul %93, %95, %cst_64 {dimension_numbers = #tpu.dot_dimension_numbers<[1], [0], [0], [1], [0, 0, 1, 1], [], []>} : vector<16x8xbf16>, vector<8x8xbf16>, vector<16x8xf32> -> vector<16x8xf32>
    %97 = arith.addf %92, %96 : vector<16x8xf32>
    %98 = vector.extract_strided_slice %36 {offsets = [16, 0], sizes = [16, 8], strides = [1, 1]} : vector<48x8xbf16> to vector<16x8xbf16>
    %c12 = arith.constant 12 : index
    %c0_65 = arith.constant 0 : index
    %c0_66 = arith.constant 0 : index
    %99 = vector.load %arg6[%c12, %c0_65, %c0_66] : memref<25x8x8xbf16, #tpu.memory_space<vmem>>, vector<1x8x8xbf16>
    %100 = vector.shape_cast %99 : vector<1x8x8xbf16> to vector<8x8xbf16>
    %cst_67 = arith.constant dense<0.000000e+00> : vector<16x8xf32>
    %101 = tpu.matmul %98, %100, %cst_67 {dimension_numbers = #tpu.dot_dimension_numbers<[1], [0], [0], [1], [0, 0, 1, 1], [], []>} : vector<16x8xbf16>, vector<8x8xbf16>, vector<16x8xf32> -> vector<16x8xf32>
    %102 = arith.addf %97, %101 : vector<16x8xf32>
    %103 = vector.extract_strided_slice %36 {offsets = [17, 0], sizes = [16, 8], strides = [1, 1]} : vector<48x8xbf16> to vector<16x8xbf16>
    %c13 = arith.constant 13 : index
    %c0_68 = arith.constant 0 : index
    %c0_69 = arith.constant 0 : index
    %104 = vector.load %arg6[%c13, %c0_68, %c0_69] : memref<25x8x8xbf16, #tpu.memory_space<vmem>>, vector<1x8x8xbf16>
    %105 = vector.shape_cast %104 : vector<1x8x8xbf16> to vector<8x8xbf16>
    %cst_70 = arith.constant dense<0.000000e+00> : vector<16x8xf32>
    %106 = tpu.matmul %103, %105, %cst_70 {dimension_numbers = #tpu.dot_dimension_numbers<[1], [0], [0], [1], [0, 0, 1, 1], [], []>} : vector<16x8xbf16>, vector<8x8xbf16>, vector<16x8xf32> -> vector<16x8xf32>
    %107 = arith.addf %102, %106 : vector<16x8xf32>
    %108 = vector.extract_strided_slice %36 {offsets = [18, 0], sizes = [16, 8], strides = [1, 1]} : vector<48x8xbf16> to vector<16x8xbf16>
    %c14 = arith.constant 14 : index
    %c0_71 = arith.constant 0 : index
    %c0_72 = arith.constant 0 : index
    %109 = vector.load %arg6[%c14, %c0_71, %c0_72] : memref<25x8x8xbf16, #tpu.memory_space<vmem>>, vector<1x8x8xbf16>
    %110 = vector.shape_cast %109 : vector<1x8x8xbf16> to vector<8x8xbf16>
    %cst_73 = arith.constant dense<0.000000e+00> : vector<16x8xf32>
    %111 = tpu.matmul %108, %110, %cst_73 {dimension_numbers = #tpu.dot_dimension_numbers<[1], [0], [0], [1], [0, 0, 1, 1], [], []>} : vector<16x8xbf16>, vector<8x8xbf16>, vector<16x8xf32> -> vector<16x8xf32>
    %112 = arith.addf %107, %111 : vector<16x8xf32>
    %113 = vector.extract_strided_slice %36 {offsets = [19, 0], sizes = [16, 8], strides = [1, 1]} : vector<48x8xbf16> to vector<16x8xbf16>
    %c15 = arith.constant 15 : index
    %c0_74 = arith.constant 0 : index
    %c0_75 = arith.constant 0 : index
    %114 = vector.load %arg6[%c15, %c0_74, %c0_75] : memref<25x8x8xbf16, #tpu.memory_space<vmem>>, vector<1x8x8xbf16>
    %115 = vector.shape_cast %114 : vector<1x8x8xbf16> to vector<8x8xbf16>
    %cst_76 = arith.constant dense<0.000000e+00> : vector<16x8xf32>
    %116 = tpu.matmul %113, %115, %cst_76 {dimension_numbers = #tpu.dot_dimension_numbers<[1], [0], [0], [1], [0, 0, 1, 1], [], []>} : vector<16x8xbf16>, vector<8x8xbf16>, vector<16x8xf32> -> vector<16x8xf32>
    %117 = arith.addf %112, %116 : vector<16x8xf32>
    %118 = vector.extract_strided_slice %36 {offsets = [20, 0], sizes = [16, 8], strides = [1, 1]} : vector<48x8xbf16> to vector<16x8xbf16>
    %c16 = arith.constant 16 : index
    %c0_77 = arith.constant 0 : index
    %c0_78 = arith.constant 0 : index
    %119 = vector.load %arg6[%c16, %c0_77, %c0_78] : memref<25x8x8xbf16, #tpu.memory_space<vmem>>, vector<1x8x8xbf16>
    %120 = vector.shape_cast %119 : vector<1x8x8xbf16> to vector<8x8xbf16>
    %cst_79 = arith.constant dense<0.000000e+00> : vector<16x8xf32>
    %121 = tpu.matmul %118, %120, %cst_79 {dimension_numbers = #tpu.dot_dimension_numbers<[1], [0], [0], [1], [0, 0, 1, 1], [], []>} : vector<16x8xbf16>, vector<8x8xbf16>, vector<16x8xf32> -> vector<16x8xf32>
    %122 = arith.addf %117, %121 : vector<16x8xf32>
    %123 = vector.extract_strided_slice %36 {offsets = [21, 0], sizes = [16, 8], strides = [1, 1]} : vector<48x8xbf16> to vector<16x8xbf16>
    %c17 = arith.constant 17 : index
    %c0_80 = arith.constant 0 : index
    %c0_81 = arith.constant 0 : index
    %124 = vector.load %arg6[%c17, %c0_80, %c0_81] : memref<25x8x8xbf16, #tpu.memory_space<vmem>>, vector<1x8x8xbf16>
    %125 = vector.shape_cast %124 : vector<1x8x8xbf16> to vector<8x8xbf16>
    %cst_82 = arith.constant dense<0.000000e+00> : vector<16x8xf32>
    %126 = tpu.matmul %123, %125, %cst_82 {dimension_numbers = #tpu.dot_dimension_numbers<[1], [0], [0], [1], [0, 0, 1, 1], [], []>} : vector<16x8xbf16>, vector<8x8xbf16>, vector<16x8xf32> -> vector<16x8xf32>
    %127 = arith.addf %122, %126 : vector<16x8xf32>
    %128 = vector.extract_strided_slice %36 {offsets = [22, 0], sizes = [16, 8], strides = [1, 1]} : vector<48x8xbf16> to vector<16x8xbf16>
    %c18 = arith.constant 18 : index
    %c0_83 = arith.constant 0 : index
    %c0_84 = arith.constant 0 : index
    %129 = vector.load %arg6[%c18, %c0_83, %c0_84] : memref<25x8x8xbf16, #tpu.memory_space<vmem>>, vector<1x8x8xbf16>
    %130 = vector.shape_cast %129 : vector<1x8x8xbf16> to vector<8x8xbf16>
    %cst_85 = arith.constant dense<0.000000e+00> : vector<16x8xf32>
    %131 = tpu.matmul %128, %130, %cst_85 {dimension_numbers = #tpu.dot_dimension_numbers<[1], [0], [0], [1], [0, 0, 1, 1], [], []>} : vector<16x8xbf16>, vector<8x8xbf16>, vector<16x8xf32> -> vector<16x8xf32>
    %132 = arith.addf %127, %131 : vector<16x8xf32>
    %133 = vector.extract_strided_slice %36 {offsets = [23, 0], sizes = [16, 8], strides = [1, 1]} : vector<48x8xbf16> to vector<16x8xbf16>
    %c19 = arith.constant 19 : index
    %c0_86 = arith.constant 0 : index
    %c0_87 = arith.constant 0 : index
    %134 = vector.load %arg6[%c19, %c0_86, %c0_87] : memref<25x8x8xbf16, #tpu.memory_space<vmem>>, vector<1x8x8xbf16>
    %135 = vector.shape_cast %134 : vector<1x8x8xbf16> to vector<8x8xbf16>
    %cst_88 = arith.constant dense<0.000000e+00> : vector<16x8xf32>
    %136 = tpu.matmul %133, %135, %cst_88 {dimension_numbers = #tpu.dot_dimension_numbers<[1], [0], [0], [1], [0, 0, 1, 1], [], []>} : vector<16x8xbf16>, vector<8x8xbf16>, vector<16x8xf32> -> vector<16x8xf32>
    %137 = arith.addf %132, %136 : vector<16x8xf32>
    %138 = vector.extract_strided_slice %36 {offsets = [24, 0], sizes = [16, 8], strides = [1, 1]} : vector<48x8xbf16> to vector<16x8xbf16>
    %c20 = arith.constant 20 : index
    %c0_89 = arith.constant 0 : index
    %c0_90 = arith.constant 0 : index
    %139 = vector.load %arg6[%c20, %c0_89, %c0_90] : memref<25x8x8xbf16, #tpu.memory_space<vmem>>, vector<1x8x8xbf16>
    %140 = vector.shape_cast %139 : vector<1x8x8xbf16> to vector<8x8xbf16>
    %cst_91 = arith.constant dense<0.000000e+00> : vector<16x8xf32>
    %141 = tpu.matmul %138, %140, %cst_91 {dimension_numbers = #tpu.dot_dimension_numbers<[1], [0], [0], [1], [0, 0, 1, 1], [], []>} : vector<16x8xbf16>, vector<8x8xbf16>, vector<16x8xf32> -> vector<16x8xf32>
    %142 = arith.addf %137, %141 : vector<16x8xf32>
    %143 = vector.extract_strided_slice %36 {offsets = [25, 0], sizes = [16, 8], strides = [1, 1]} : vector<48x8xbf16> to vector<16x8xbf16>
    %c21 = arith.constant 21 : index
    %c0_92 = arith.constant 0 : index
    %c0_93 = arith.constant 0 : index
    %144 = vector.load %arg6[%c21, %c0_92, %c0_93] : memref<25x8x8xbf16, #tpu.memory_space<vmem>>, vector<1x8x8xbf16>
    %145 = vector.shape_cast %144 : vector<1x8x8xbf16> to vector<8x8xbf16>
    %cst_94 = arith.constant dense<0.000000e+00> : vector<16x8xf32>
    %146 = tpu.matmul %143, %145, %cst_94 {dimension_numbers = #tpu.dot_dimension_numbers<[1], [0], [0], [1], [0, 0, 1, 1], [], []>} : vector<16x8xbf16>, vector<8x8xbf16>, vector<16x8xf32> -> vector<16x8xf32>
    %147 = arith.addf %142, %146 : vector<16x8xf32>
    %148 = vector.extract_strided_slice %36 {offsets = [26, 0], sizes = [16, 8], strides = [1, 1]} : vector<48x8xbf16> to vector<16x8xbf16>
    %c22 = arith.constant 22 : index
    %c0_95 = arith.constant 0 : index
    %c0_96 = arith.constant 0 : index
    %149 = vector.load %arg6[%c22, %c0_95, %c0_96] : memref<25x8x8xbf16, #tpu.memory_space<vmem>>, vector<1x8x8xbf16>
    %150 = vector.shape_cast %149 : vector<1x8x8xbf16> to vector<8x8xbf16>
    %cst_97 = arith.constant dense<0.000000e+00> : vector<16x8xf32>
    %151 = tpu.matmul %148, %150, %cst_97 {dimension_numbers = #tpu.dot_dimension_numbers<[1], [0], [0], [1], [0, 0, 1, 1], [], []>} : vector<16x8xbf16>, vector<8x8xbf16>, vector<16x8xf32> -> vector<16x8xf32>
    %152 = arith.addf %147, %151 : vector<16x8xf32>
    %153 = vector.extract_strided_slice %36 {offsets = [27, 0], sizes = [16, 8], strides = [1, 1]} : vector<48x8xbf16> to vector<16x8xbf16>
    %c23 = arith.constant 23 : index
    %c0_98 = arith.constant 0 : index
    %c0_99 = arith.constant 0 : index
    %154 = vector.load %arg6[%c23, %c0_98, %c0_99] : memref<25x8x8xbf16, #tpu.memory_space<vmem>>, vector<1x8x8xbf16>
    %155 = vector.shape_cast %154 : vector<1x8x8xbf16> to vector<8x8xbf16>
    %cst_100 = arith.constant dense<0.000000e+00> : vector<16x8xf32>
    %156 = tpu.matmul %153, %155, %cst_100 {dimension_numbers = #tpu.dot_dimension_numbers<[1], [0], [0], [1], [0, 0, 1, 1], [], []>} : vector<16x8xbf16>, vector<8x8xbf16>, vector<16x8xf32> -> vector<16x8xf32>
    %157 = arith.addf %152, %156 : vector<16x8xf32>
    %158 = vector.extract_strided_slice %36 {offsets = [28, 0], sizes = [16, 8], strides = [1, 1]} : vector<48x8xbf16> to vector<16x8xbf16>
    %c24 = arith.constant 24 : index
    %c0_101 = arith.constant 0 : index
    %c0_102 = arith.constant 0 : index
    %159 = vector.load %arg6[%c24, %c0_101, %c0_102] : memref<25x8x8xbf16, #tpu.memory_space<vmem>>, vector<1x8x8xbf16>
    %160 = vector.shape_cast %159 : vector<1x8x8xbf16> to vector<8x8xbf16>
    %cst_103 = arith.constant dense<0.000000e+00> : vector<16x8xf32>
    %161 = tpu.matmul %158, %160, %cst_103 {dimension_numbers = #tpu.dot_dimension_numbers<[1], [0], [0], [1], [0, 0, 1, 1], [], []>} : vector<16x8xbf16>, vector<8x8xbf16>, vector<16x8xf32> -> vector<16x8xf32>
    %162 = arith.addf %157, %161 : vector<16x8xf32>
    %c0_104 = arith.constant 0 : index
    %c0_105 = arith.constant 0 : index
    %163 = vector.load %arg9[%c0_104, %c0_105] : memref<1x8xf32, #tpu.memory_space<vmem>>, vector<1x8xf32>
    %164 = vector.broadcast %163 : vector<1x8xf32> to vector<16x8xf32>
    %165 = arith.addf %162, %164 : vector<16x8xf32>
    %cst_106 = arith.constant 0.000000e+00 : f32
    %166 = vector.broadcast %cst_106 : f32 to vector<16x8xf32>
    %167 = arith.maximumf %165, %166 : vector<16x8xf32>
    %168 = arith.truncf %167 : vector<16x8xf32> to vector<16x8xbf16>
    %c0_107 = arith.constant 0 : index
    %c0_108 = arith.constant 0 : index
    %169 = vector.load %arg7[%c0_107, %c0_108] : memref<8x32xbf16, #tpu.memory_space<vmem>>, vector<8x32xbf16>
    %cst_109 = arith.constant dense<0.000000e+00> : vector<16x32xf32>
    %170 = tpu.matmul %168, %169, %cst_109 {dimension_numbers = #tpu.dot_dimension_numbers<[1], [0], [0], [1], [0, 0, 1, 1], [], []>} : vector<16x8xbf16>, vector<8x32xbf16>, vector<16x32xf32> -> vector<16x32xf32>
    %c0_110 = arith.constant 0 : index
    %c0_111 = arith.constant 0 : index
    %171 = vector.load %arg10[%c0_110, %c0_111] : memref<1x32xf32, #tpu.memory_space<vmem>>, vector<1x32xf32>
    %172 = vector.broadcast %171 : vector<1x32xf32> to vector<16x32xf32>
    %173 = arith.addf %170, %172 : vector<16x32xf32>
    %c0_112 = arith.constant 0 : index
    %c0_113 = arith.constant 0 : index
    %c0_114 = arith.constant 0 : index
    %174 = vector.load %arg3[%c0_112, %c0_113, %c0_114] : memref<1x16x32xbf16, #tpu.memory_space<vmem>>, vector<1x16x32xbf16>
    %175 = vector.shape_cast %174 : vector<1x16x32xbf16> to vector<16x32xbf16>
    %176 = arith.extf %175 : vector<16x32xbf16> to vector<16x32xf32>
    %177 = arith.addf %173, %176 : vector<16x32xf32>
    %cst_115 = arith.constant 0.000000e+00 : f32
    %178 = vector.broadcast %cst_115 : f32 to vector<16x32xf32>
    %179 = arith.maximumf %177, %178 : vector<16x32xf32>
    %180 = arith.truncf %179 : vector<16x32xf32> to vector<16x32xbf16>
    %c0_116 = arith.constant 0 : index
    %c0_117 = arith.constant 0 : index
    %c0_118 = arith.constant 0 : index
    %181 = vector.load %arg11[%c0_116, %c0_117, %c0_118] : memref<1x16x32xbf16, #tpu.memory_space<vmem>>, vector<1x16x32xbf16>
    %182 = vector.shape_cast %181 : vector<1x16x32xbf16> to vector<16x32xbf16>
    %183 = vector.shape_cast %180 : vector<16x32xbf16> to vector<1x16x32xbf16>
    tpu.vector_store %arg11[%c0_116, %c0_117, %c0_118], %183 {strides = array<i32>} : memref<1x16x32xbf16, #tpu.memory_space<vmem>>, vector<1x16x32xbf16>,
    return
  }
  func.func @transform_0(%arg0: i32, %arg1: i32) -> (i32, i32, i32) {
    %c1_i32 = arith.constant 1 : i32
    %0 = arith.muli %arg1, %c1_i32 : i32
    %c1_i32_0 = arith.constant 1 : i32
    %1 = arith.subi %0, %c1_i32_0 : i32
    %c0_i32 = arith.constant 0 : i32
    %2 = arith.maxsi %1, %c0_i32 : i32
    %c0_i32_1 = arith.constant 0 : i32
    %c0_i32_2 = arith.constant 0 : i32
    return %arg0, %2, %c0_i32_1 : i32, i32, i32
  }
  func.func @transform_1(%arg0: i32, %arg1: i32) -> (i32, i32, i32) {
    %c0_i32 = arith.constant 0 : i32
    %c0_i32_0 = arith.constant 0 : i32
    return %arg0, %arg1, %c0_i32 : i32, i32, i32
  }
  func.func @transform_2(%arg0: i32, %arg1: i32) -> (i32, i32, i32) {
    %c1_i32 = arith.constant 1 : i32
    %0 = arith.addi %arg1, %c1_i32 : i32
    %c1_i32_0 = arith.constant 1 : i32
    %1 = arith.muli %0, %c1_i32_0 : i32
    %c1_i32_1 = arith.constant 1 : i32
    %2 = arith.minsi %1, %c1_i32_1 : i32
    %c0_i32 = arith.constant 0 : i32
    %c0_i32_2 = arith.constant 0 : i32
    return %arg0, %2, %c0_i32 : i32, i32, i32
  }
  func.func @transform_3(%arg0: i32, %arg1: i32) -> (i32, i32) {
    %c0_i32 = arith.constant 0 : i32
    %c0_i32_0 = arith.constant 0 : i32
    %c0_i32_1 = arith.constant 0 : i32
    return %c0_i32, %c0_i32_0 : i32, i32
  }
  func.func @transform_4(%arg0: i32, %arg1: i32) -> (i32, i32, i32) {
    %c0_i32 = arith.constant 0 : i32
    %c0_i32_0 = arith.constant 0 : i32
    %c0_i32_1 = arith.constant 0 : i32
    %c0_i32_2 = arith.constant 0 : i32
    return %c0_i32, %c0_i32_0, %c0_i32_1 : i32, i32, i32
  }
  func.func @transform_5(%arg0: i32, %arg1: i32) -> (i32, i32) {
    %c0_i32 = arith.constant 0 : i32
    %c0_i32_0 = arith.constant 0 : i32
    %c0_i32_1 = arith.constant 0 : i32
    return %c0_i32, %c0_i32_0 : i32, i32
  }
  func.func @transform_6(%arg0: i32, %arg1: i32) -> (i32, i32) {
    %c0_i32 = arith.constant 0 : i32
    %c0_i32_0 = arith.constant 0 : i32
    %c0_i32_1 = arith.constant 0 : i32
    return %c0_i32, %c0_i32_0 : i32, i32
  }
  func.func @transform_7(%arg0: i32, %arg1: i32) -> (i32, i32) {
    %c0_i32 = arith.constant 0 : i32
    %c0_i32_0 = arith.constant 0 : i32
    %c0_i32_1 = arith.constant 0 : i32
    return %c0_i32, %c0_i32_0 : i32, i32
  }
  func.func @transform_8(%arg0: i32, %arg1: i32) -> (i32, i32) {
    %c0_i32 = arith.constant 0 : i32
    %c0_i32_0 = arith.constant 0 : i32
    %c0_i32_1 = arith.constant 0 : i32
    return %c0_i32, %c0_i32_0 : i32, i32
  }
  func.func @transform_9(%arg0: i32, %arg1: i32) -> (i32, i32, i32) {
    %c0_i32 = arith.constant 0 : i32
    %c0_i32_0 = arith.constant 0 : i32
    return %arg0, %arg1, %c0_i32 : i32, i32, i32
  }
}

</mosaic_0001>

<llo_original>
// kernel: tpu_custom_call.1
$region0: #{tpu_custom_call.1}
  #allocation0 [shape = 'u32[]', space=smem, size = 0x4, offset = 0x4, fixed_abs, tag = 'smem constant byte address 0x4 - core index']
  #allocation1 [shape = 'u32[72,128]{1,0:T(1,128)}', space=vmem, size = 0x9000, scoped, tag = 'internal scratch']
  %s0 = inlined_call_operand.vmem [shape: bf16[2,32,32], index: 0, kind: input, shape index: {}]
  %s1 = inlined_call_operand.vmem [shape: bf16[2,32,32], index: 1, kind: input, shape index: {}]
  %s2 = inlined_call_operand.vmem [shape: bf16[2,32,32], index: 2, kind: input, shape index: {}]
  %s3 = inlined_call_operand.vmem [shape: bf16[32,8], index: 3, kind: input, shape index: {}]
  %s4 = inlined_call_operand.vmem [shape: bf16[25,8,8], index: 4, kind: input, shape index: {}]
  %s5 = inlined_call_operand.vmem [shape: bf16[8,32], index: 5, kind: input, shape index: {}]
  %s6 = inlined_call_operand.vmem [shape: f32[1,8], index: 6, kind: input, shape index: {}]
  %s7 = inlined_call_operand.vmem [shape: f32[1,8], index: 7, kind: input, shape index: {}]
  %s8 = inlined_call_operand.vmem [shape: f32[1,32], index: 8, kind: input, shape index: {}]
  %s9 = inlined_call_operand.hbm [shape: bf16[2,32,32], index: 9, kind: output, shape index: {}]
  %s10 = sld [smem:[#allocation0]]
  $region69: #{tpu_custom_call.1} parent=0
    _
  %s12 = ssub.s32 1, %s10
  %s13 = scalar_select 0, %s12, %s10
  $region1: #{tpu_custom_call.1} parent=0
    #allocation2 [shape = 'u8[8192]{0}', space=vmem, size = 0x2000, scoped, tag = 'output window, operand 0']
    #allocation3 [shape = 's32[2]{0}', space=sflag, size = 0x8, scoped, tag = 'scoped memory for tpu_custom_call.1']
    %14 = vsyncpa [#allocation3], 0
    %s15 = scalar_lea.sflag [#allocation3], 1
    %16 = vsyncpa %s15, 0
    loop: start=0, step=1, limit=6
    $region2: #{tpu_custom_call.1} parent=1 // loop_pre_header
      _
    $region3: #{tpu_custom_call.1} parent=1 // loop_header
      %s18 = sphi 0, %s22
      %p19 = scmp.ge.s32.totalorder %s18, 6
      %s25 = sphi 0, %s37
      %s26 = sphi 0, %s33
      %s27 = sphi 0, %s25
      %s28 = sphi 0, %s26
      %s29 = sphi 0, %s27
      %s30 = sphi 0, %s28
      %s48 = sphi 0, %s50
      %s51 = sphi 0, %s48
      %s52 = sphi 0, %s51
      %s68 = sphi 0, %s52
      %s76 = sphi 0, %s78
      %s79 = sphi 0, %s76
      %s80 = sphi 0, %s79
      %s96 = sphi 0, %s80
      %s110 = sphi 0, %s112
      %s113 = sphi 0, %s110
      %s114 = sphi 0, %s113
      %s130 = sphi 0, %s114
      %s134 = sphi 0, %s134
      %s136 = sphi 0, %s134
      %s137 = sphi 0, %s136
      %s151 = sphi 0, %s137
      %s155 = sphi 0, %s155
      %s157 = sphi 0, %s155
      %s158 = sphi 0, %s157
      %s172 = sphi 0, %s158
      %s176 = sphi 0, %s176
      %s178 = sphi 0, %s176
      %s179 = sphi 0, %s178
      %s193 = sphi 0, %s179
      %s197 = sphi 0, %s197
      %s199 = sphi 0, %s197
      %s200 = sphi 0, %s199
      %s214 = sphi 0, %s200
      %s218 = sphi 0, %s218
      %s220 = sphi 0, %s218
      %s221 = sphi 0, %s220
      %s235 = sphi 0, %s221
      %s239 = sphi 0, %s239
      %s241 = sphi 0, %s239
      %s242 = sphi 0, %s241
      %s256 = sphi 0, %s242
      %s264 = sphi 0, %s266
      %s267 = sphi 0, %s264
      %s268 = sphi 0, %s267
      %s284 = sphi 0, %s268
    $region4: #{tpu_custom_call.1} parent=1 // loop_header_branch
      %21 = sbr.rel (%p19) target = $region8
    $region5: #{tpu_custom_call.1} parent=1 // loop_body
      %s23 = ssub.s32 %s18, 1
      %s24 = ssub.s32 %s18, 2
      %s31 = sadd.s32 1, %s26
      %p32 = scmp.ge.s32.totalorder %s31, 2
      %s33 = scalar_select %p32, 0, %s31
      %s34 = sadd.s32 1, %s25
      %s35 = scalar_select %p32, %s34, %s25
      %p36 = scmp.ge.s32.totalorder %s35, 2
      %s37 = scalar_select %p36, 0, %s35
      %s38 = ssub.s32 %s26, 1
      %p39 = scmp.gt.s32.totalorder %s38, 0
      %s40 = scalar_select %p39, %s38, 0
      %s41 = ssub.s32 %s33, 1
      %p42 = scmp.gt.s32.totalorder %s41, 0
      %s43 = scalar_select %p42, %s41, 0
      %s44 = ssub.s32 %s25, %s37
      %s45 = ssub.s32 %s40, %s43
      %s46 = sor.u32 %s44, %s45
      %p47 = scmp.eq.s32.totalorder %s46, 0
      %s49 = sadd.s32 %s48, 1
      %s50 = scalar_select %p47, %s48, %s49
      %p53 = pneg %p47
      %p54 = scmp.eq.s32.totalorder %s18, 3
      %p55 = por %p53, %p54
      %p56 = scmp.ne.s32.totalorder %s48, %s51
      %p57 = scmp.eq.s32.totalorder %s18, 0
      %p58 = por %p56, %p57
      %p59 = scmp.ne.s32.totalorder %s48, %s51
      %p60 = scmp.eq.s32.totalorder %s23, 3
      %p61 = por %p59, %p60
      %p62 = scmp.ne.s32.totalorder %s51, %s52
      %p63 = scmp.eq.s32.totalorder %s23, 0
      %p64 = por %p62, %p63
      %p65 = scmp.ne.s32.totalorder %s51, %s52
      %p66 = scmp.eq.s32.totalorder %s24, 3
      %p67 = por %p65, %p66
      %p69 = scmp.ne.s32.totalorder %s52, %s68
      %p70 = scmp.eq.s32.totalorder %s24, 0
      %p71 = por %p69, %p70
      %s72 = ssub.s32 %s25, %s37
      %s73 = ssub.s32 %s26, %s33
      %s74 = sor.u32 %s72, %s73
      %p75 = scmp.eq.s32.totalorder %s74, 0
      %s77 = sadd.s32 %s76, 1
      %s78 = scalar_select %p75, %s76, %s77
      %p81 = pneg %p75
      %p82 = scmp.eq.s32.totalorder %s18, 3
      %p83 = por %p81, %p82
      %p84 = scmp.ne.s32.totalorder %s76, %s79
      %p85 = scmp.eq.s32.totalorder %s18, 0
      %p86 = por %p84, %p85
      %p87 = scmp.ne.s32.totalorder %s76, %s79
      %p88 = scmp.eq.s32.totalorder %s23, 3
      %p89 = por %p87, %p88
      %p90 = scmp.ne.s32.totalorder %s79, %s80
      %p91 = scmp.eq.s32.totalorder %s23, 0
      %p92 = por %p90, %p91
      %p93 = scmp.ne.s32.totalorder %s79, %s80
      %p94 = scmp.eq.s32.totalorder %s24, 3
      %p95 = por %p93, %p94
      %p97 = scmp.ne.s32.totalorder %s80, %s96
      %p98 = scmp.eq.s32.totalorder %s24, 0
      %p99 = por %p97, %p98
      %s100 = sadd.s32 %s26, 1
      %p101 = scmp.lt.s32.totalorder %s100, 1
      %s102 = scalar_select %p101, %s100, 1
      %s103 = sadd.s32 %s33, 1
      %p104 = scmp.lt.s32.totalorder %s103, 1
      %s105 = scalar_select %p104, %s103, 1
      %s106 = ssub.s32 %s25, %s37
      %s107 = ssub.s32 %s102, %s105
      %s108 = sor.u32 %s106, %s107
      %p109 = scmp.eq.s32.totalorder %s108, 0
      %s111 = sadd.s32 %s110, 1
      %s112 = scalar_select %p109, %s110, %s111
      %p115 = pneg %p109
      %p116 = scmp.eq.s32.totalorder %s18, 3
      %p117 = por %p115, %p116
      %p118 = scmp.ne.s32.totalorder %s110, %s113
      %p119 = scmp.eq.s32.totalorder %s18, 0
      %p120 = por %p118, %p119
      %p121 = scmp.ne.s32.totalorder %s110, %s113
      %p122 = scmp.eq.s32.totalorder %s23, 3
      %p123 = por %p121, %p122
      %p124 = scmp.ne.s32.totalorder %s113, %s114
      %p125 = scmp.eq.s32.totalorder %s23, 0
      %p126 = por %p124, %p125
      %p127 = scmp.ne.s32.totalorder %s113, %s114
      %p128 = scmp.eq.s32.totalorder %s24, 3
      %p129 = por %p127, %p128
      %p131 = scmp.ne.s32.totalorder %s114, %s130
      %p132 = scmp.eq.s32.totalorder %s24, 0
      %p133 = por %p131, %p132
      %s135 = sadd.s32 %s134, 1
      %p138 = scmp.eq.s32.totalorder %s18, 3
      %p139 = scmp.ne.s32.totalorder %s134, %s136
      %p140 = scmp.eq.s32.totalorder %s18, 0
      %p141 = por %p139, %p140
      %p142 = scmp.ne.s32.totalorder %s134, %s136
      %p143 = scmp.eq.s32.totalorder %s23, 3
      %p144 = por %p142, %p143
      %p145 = scmp.ne.s32.totalorder %s136, %s137
      %p146 = scmp.eq.s32.totalorder %s23, 0
      %p147 = por %p145, %p146
      %p148 = scmp.ne.s32.totalorder %s136, %s137
      %p149 = scmp.eq.s32.totalorder %s24, 3
      %p150 = por %p148, %p149
      %p152 = scmp.ne.s32.totalorder %s137, %s151
      %p153 = scmp.eq.s32.totalorder %s24, 0
      %p154 = por %p152, %p153
      %s156 = sadd.s32 %s155, 1
      %p159 = scmp.eq.s32.totalorder %s18, 3
      %p160 = scmp.ne.s32.totalorder %s155, %s157
      %p161 = scmp.eq.s32.totalorder %s18, 0
      %p162 = por %p160, %p161
      %p163 = scmp.ne.s32.totalorder %s155, %s157
      %p164 = scmp.eq.s32.totalorder %s23, 3
      %p165 = por %p163, %p164
      %p166 = scmp.ne.s32.totalorder %s157, %s158
      %p167 = scmp.eq.s32.totalorder %s23, 0
      %p168 = por %p166, %p167
      %p169 = scmp.ne.s32.totalorder %s157, %s158
      %p170 = scmp.eq.s32.totalorder %s24, 3
      %p171 = por %p169, %p170
      %p173 = scmp.ne.s32.totalorder %s158, %s172
      %p174 = scmp.eq.s32.totalorder %s24, 0
      %p175 = por %p173, %p174
      %s177 = sadd.s32 %s176, 1
      %p180 = scmp.eq.s32.totalorder %s18, 3
      %p181 = scmp.ne.s32.totalorder %s176, %s178
      %p182 = scmp.eq.s32.totalorder %s18, 0
      %p183 = por %p181, %p182
      %p184 = scmp.ne.s32.totalorder %s176, %s178
      %p185 = scmp.eq.s32.totalorder %s23, 3
      %p186 = por %p184, %p185
      %p187 = scmp.ne.s32.totalorder %s178, %s179
      %p188 = scmp.eq.s32.totalorder %s23, 0
      %p189 = por %p187, %p188
      %p190 = scmp.ne.s32.totalorder %s178, %s179
      %p191 = scmp.eq.s32.totalorder %s24, 3
      %p192 = por %p190, %p191
      %p194 = scmp.ne.s32.totalorder %s179, %s193
      %p195 = scmp.eq.s32.totalorder %s24, 0
      %p196 = por %p194, %p195
      %s198 = sadd.s32 %s197, 1
      %p201 = scmp.eq.s32.totalorder %s18, 3
      %p202 = scmp.ne.s32.totalorder %s197, %s199
      %p203 = scmp.eq.s32.totalorder %s18, 0
      %p204 = por %p202, %p203
      %p205 = scmp.ne.s32.totalorder %s197, %s199
      %p206 = scmp.eq.s32.totalorder %s23, 3
      %p207 = por %p205, %p206
      %p208 = scmp.ne.s32.totalorder %s199, %s200
      %p209 = scmp.eq.s32.totalorder %s23, 0
      %p210 = por %p208, %p209
      %p211 = scmp.ne.s32.totalorder %s199, %s200
      %p212 = scmp.eq.s32.totalorder %s24, 3
      %p213 = por %p211, %p212
      %p215 = scmp.ne.s32.totalorder %s200, %s214
      %p216 = scmp.eq.s32.totalorder %s24, 0
      %p217 = por %p215, %p216
      %s219 = sadd.s32 %s218, 1
      %p222 = scmp.eq.s32.totalorder %s18, 3
      %p223 = scmp.ne.s32.totalorder %s218, %s220
      %p224 = scmp.eq.s32.totalorder %s18, 0
      %p225 = por %p223, %p224
      %p226 = scmp.ne.s32.totalorder %s218, %s220
      %p227 = scmp.eq.s32.totalorder %s23, 3
      %p228 = por %p226, %p227
      %p229 = scmp.ne.s32.totalorder %s220, %s221
      %p230 = scmp.eq.s32.totalorder %s23, 0
      %p231 = por %p229, %p230
      %p232 = scmp.ne.s32.totalorder %s220, %s221
      %p233 = scmp.eq.s32.totalorder %s24, 3
      %p234 = por %p232, %p233
      %p236 = scmp.ne.s32.totalorder %s221, %s235
      %p237 = scmp.eq.s32.totalorder %s24, 0
      %p238 = por %p236, %p237
      %s240 = sadd.s32 %s239, 1
      %p243 = scmp.eq.s32.totalorder %s18, 3
      %p244 = scmp.ne.s32.totalorder %s239, %s241
      %p245 = scmp.eq.s32.totalorder %s18, 0
      %p246 = por %p244, %p245
      %p247 = scmp.ne.s32.totalorder %s239, %s241
      %p248 = scmp.eq.s32.totalorder %s23, 3
      %p249 = por %p247, %p248
      %p250 = scmp.ne.s32.totalorder %s241, %s242
      %p251 = scmp.eq.s32.totalorder %s23, 0
      %p252 = por %p250, %p251
      %p253 = scmp.ne.s32.totalorder %s241, %s242
      %p254 = scmp.eq.s32.totalorder %s24, 3
      %p255 = por %p253, %p254
      %p257 = scmp.ne.s32.totalorder %s242, %s256
      %p258 = scmp.eq.s32.totalorder %s24, 0
      %p259 = por %p257, %p258
      %s260 = ssub.s32 %s25, %s37
      %s261 = ssub.s32 %s26, %s33
      %s262 = sor.u32 %s260, %s261
      %p263 = scmp.eq.s32.totalorder %s262, 0
      %s265 = sadd.s32 %s264, 1
      %s266 = scalar_select %p263, %s264, %s265
      %p269 = pneg %p263
      %p270 = scmp.eq.s32.totalorder %s18, 3
      %p271 = por %p269, %p270
      %p272 = scmp.ne.s32.totalorder %s264, %s267
      %p273 = scmp.eq.s32.totalorder %s18, 0
      %p274 = por %p272, %p273
      %p275 = scmp.ne.s32.totalorder %s264, %s267
      %p276 = scmp.eq.s32.totalorder %s23, 3
      %p277 = por %p275, %p276
      %p278 = scmp.ne.s32.totalorder %s267, %s268
      %p279 = scmp.eq.s32.totalorder %s23, 0
      %p280 = por %p278, %p279
      %p281 = scmp.ne.s32.totalorder %s267, %s268
      %p282 = scmp.eq.s32.totalorder %s24, 3
      %p283 = por %p281, %p282
      %p285 = scmp.ne.s32.totalorder %s268, %s284
      %p286 = scmp.eq.s32.totalorder %s24, 0
      %p287 = por %p285, %p286
      %p288 = scmp.le.s32.totalorder 1, %s18
      %p289 = scmp.lt.s32.totalorder %s18, 5
      %p290 = pnand %p288, %p289
      %p291 = pneg %p290
      // Predicated region
      $region9: #{tpu_custom_call.1} parent=5 // pred_check
        _
      $region10: #{tpu_custom_call.1} parent=5 // pred_check_branch
        %293 = sbr.rel (%p290) target = $region12
      $region11: #{tpu_custom_call.1} parent=5 // pred_region
        %s294 = ssub.s32 %s18, 1
        // Predicated region
        $region13: #{tpu_custom_call.1} parent=11 // pred_check
          %p295 = pneg %p147
        $region14: #{tpu_custom_call.1} parent=11 // pred_check_branch
          %297 = sbr.rel (%p295) target = $region16
        $region15: #{tpu_custom_call.1} parent=11 // pred_region
          _
        $region16: #{tpu_custom_call.1} parent=11 // pred_fallthru
          _
        // Predicated region
        $region17: #{tpu_custom_call.1} parent=11 // pred_check
          %p298 = pneg %p168
        $region18: #{tpu_custom_call.1} parent=11 // pred_check_branch
          %300 = sbr.rel (%p298) target = $region20
        $region19: #{tpu_custom_call.1} parent=11 // pred_region
          _
        $region20: #{tpu_custom_call.1} parent=11 // pred_fallthru
          _
        // Predicated region
        $region21: #{tpu_custom_call.1} parent=11 // pred_check
          %p301 = pneg %p189
        $region22: #{tpu_custom_call.1} parent=11 // pred_check_branch
          %303 = sbr.rel (%p301) target = $region24
        $region23: #{tpu_custom_call.1} parent=11 // pred_region
          _
        $region24: #{tpu_custom_call.1} parent=11 // pred_fallthru
          _
        // Predicated region
        $region25: #{tpu_custom_call.1} parent=11 // pred_check
          %p304 = pneg %p210
        $region26: #{tpu_custom_call.1} parent=11 // pred_check_branch
          %306 = sbr.rel (%p304) target = $region28
        $region27: #{tpu_custom_call.1} parent=11 // pred_region
          _
        $region28: #{tpu_custom_call.1} parent=11 // pred_fallthru
          _
        // Predicated region
        $region29: #{tpu_custom_call.1} parent=11 // pred_check
          %p307 = pneg %p231
        $region30: #{tpu_custom_call.1} parent=11 // pred_check_branch
          %309 = sbr.rel (%p307) target = $region32
        $region31: #{tpu_custom_call.1} parent=11 // pred_region
          _
        $region32: #{tpu_custom_call.1} parent=11 // pred_fallthru
          _
        // Predicated region
        $region33: #{tpu_custom_call.1} parent=11 // pred_check
          %p310 = pneg %p252
        $region34: #{tpu_custom_call.1} parent=11 // pred_check_branch
          %312 = sbr.rel (%p310) target = $region36
        $region35: #{tpu_custom_call.1} parent=11 // pred_region
          _
        $region36: #{tpu_custom_call.1} parent=11 // pred_fallthru
          _
      $region12: #{tpu_custom_call.1} parent=5 // pred_fallthru
        _
      %p313 = scmp.lt.s32.totalorder %s18, 4
      // Predicated region
      $region37: #{tpu_custom_call.1} parent=5 // pred_check
        %p314 = pneg %p313
      $region38: #{tpu_custom_call.1} parent=5 // pred_check_branch
        %316 = sbr.rel (%p314) target = $region40
      $region39: #{tpu_custom_call.1} parent=5 // pred_region
        // Predicated region
        $region41: #{tpu_custom_call.1} parent=39 // pred_check
          %p317 = pneg %p58
        $region42: #{tpu_custom_call.1} parent=39 // pred_check_branch
          %319 = sbr.rel (%p317) target = $region44
        $region43: #{tpu_custom_call.1} parent=39 // pred_region
          %s320 = ssub.s32 %s26, 1
          %p321 = scmp.gt.s32.totalorder %s320, 0
          %s322 = scalar_select %p321, %s320, 0
          %s323 = smul.u32 2, %s322
          %p324 = scmp.lt.s32.totalorder %s25, 1
          %s325 = scalar_select %p324, %s25, 1
          %p326 = scmp.lt.s32.totalorder %s323, 3
          %s327 = scalar_select %p326, %s323, 3
          %s328 = smul.addr %s325, 4
          %s329 = sadd.s32 %s327, %s328
          %s330 = smul.addr %s329, 4
          %s331 = scalar_lea.vmem %s0, %s330
          %s332 = ssub.s32 %s26, 1
          %p333 = scmp.gt.s32.totalorder %s332, 0
          %s334 = scalar_select %p333, %s332, 0
          %s335 = smul.u32 2, %s334
        $region44: #{tpu_custom_call.1} parent=39 // pred_fallthru
          _
        // Predicated region
        $region45: #{tpu_custom_call.1} parent=39 // pred_check
          %p336 = pneg %p86
        $region46: #{tpu_custom_call.1} parent=39 // pred_check_branch
          %338 = sbr.rel (%p336) target = $region48
        $region47: #{tpu_custom_call.1} parent=39 // pred_region
          %s339 = smul.u32 2, %s26
          %p340 = scmp.lt.s32.totalorder %s25, 1
          %s341 = scalar_select %p340, %s25, 1
          %p342 = scmp.lt.s32.totalorder %s339, 3
          %s343 = scalar_select %p342, %s339, 3
          %s344 = smul.addr %s341, 4
          %s345 = sadd.s32 %s343, %s344
          %s346 = smul.addr %s345, 4
          %s347 = scalar_lea.vmem %s1, %s346
          %s348 = smul.u32 2, %s26
        $region48: #{tpu_custom_call.1} parent=39 // pred_fallthru
          _
        // Predicated region
        $region49: #{tpu_custom_call.1} parent=39 // pred_check
          %p349 = pneg %p120
        $region50: #{tpu_custom_call.1} parent=39 // pred_check_branch
          %351 = sbr.rel (%p349) target = $region52
        $region51: #{tpu_custom_call.1} parent=39 // pred_region
          %s352 = sadd.s32 %s26, 1
          %p353 = scmp.lt.s32.totalorder %s352, 1
          %s354 = scalar_select %p353, %s352, 1
          %s355 = smul.u32 2, %s354
          %p356 = scmp.lt.s32.totalorder %s25, 1
          %s357 = scalar_select %p356, %s25, 1
          %p358 = scmp.lt.s32.totalorder %s355, 3
          %s359 = scalar_select %p358, %s355, 3
          %s360 = smul.addr %s357, 4
          %s361 = sadd.s32 %s359, %s360
          %s362 = smul.addr %s361, 4
          %s363 = scalar_lea.vmem %s2, %s362
          %s364 = sadd.s32 %s26, 1
          %p365 = scmp.lt.s32.totalorder %s364, 1
          %s366 = scalar_select %p365, %s364, 1
          %s367 = smul.u32 2, %s366
        $region52: #{tpu_custom_call.1} parent=39 // pred_fallthru
          _
      $region40: #{tpu_custom_call.1} parent=5 // pred_fallthru
        _
      %p368 = scmp.le.s32.totalorder 1, %s18
      %p369 = scmp.lt.s32.totalorder %s18, 5
      %p370 = pnand %p368, %p369
      %p371 = pneg %p370
      // Predicated region
      $region53: #{tpu_custom_call.1} parent=5 // pred_check
        _
      $region54: #{tpu_custom_call.1} parent=5 // pred_check_branch
        %373 = sbr.rel (%p370) target = $region56
      $region55: #{tpu_custom_call.1} parent=5 // pred_region
        %s374 = ssub.s32 %s18, 1
        %s375 = ssub.s32 %s28, 1
        %p376 = scmp.gt.s32.totalorder %s375, 0
        %s377 = scalar_select %p376, %s375, 0
        %s378 = smul.u32 2, %s377
        %p379 = scmp.lt.s32.totalorder %s27, 1
        %s380 = scalar_select %p379, %s27, 1
        %p381 = scmp.lt.s32.totalorder %s378, 3
        %s382 = scalar_select %p381, %s378, 3
        %s383 = smul.addr %s380, 4
        %s384 = sadd.s32 %s382, %s383
        %s385 = smul.addr %s384, 4
        %s386 = scalar_lea.vmem %s0, %s385
        %p387 = pneg %p64
        %p388 = pneg %p61
        %s389 = smul.u32 2, %s28
        %p390 = scmp.lt.s32.totalorder %s27, 1
        %s391 = scalar_select %p390, %s27, 1
        %p392 = scmp.lt.s32.totalorder %s389, 3
        %s393 = scalar_select %p392, %s389, 3
        %s394 = smul.addr %s391, 4
        %s395 = sadd.s32 %s393, %s394
        %s396 = smul.addr %s395, 4
        %s397 = scalar_lea.vmem %s1, %s396
        %p398 = pneg %p92
        %p399 = pneg %p89
        %s400 = sadd.s32 %s28, 1
        %p401 = scmp.lt.s32.totalorder %s400, 1
        %s402 = scalar_select %p401, %s400, 1
        %s403 = smul.u32 2, %s402
        %p404 = scmp.lt.s32.totalorder %s27, 1
        %s405 = scalar_select %p404, %s27, 1
        %p406 = scmp.lt.s32.totalorder %s403, 3
        %s407 = scalar_select %p406, %s403, 3
        %s408 = smul.addr %s405, 4
        %s409 = sadd.s32 %s407, %s408
        %s410 = smul.addr %s409, 4
        %s411 = scalar_lea.vmem %s2, %s410
        %p412 = pneg %p126
        %p413 = pneg %p123
        %p414 = pneg %p147
        %p415 = pneg %p144
        %p416 = pneg %p168
        %p417 = pneg %p165
        %p418 = pneg %p189
        %p419 = pneg %p186
        %p420 = pneg %p210
        %p421 = pneg %p207
        %p422 = pneg %p231
        %p423 = pneg %p228
        %p424 = pneg %p252
        %p425 = pneg %p249
        %p426 = pneg %p280
        %p427 = pneg %p277
        %s428 = sand.u32 %s267, 1
        %s429 = scalar_lea.sflag [#allocation3], %s428
        %s430 = sand.u32 %s267, 1
        %s431 = smul.addr %s430, 8
        %s432 = scalar_lea.vmem [#allocation2], %s431
        %s433 = ssub.s32 %s28, 1
        %p434 = scmp.gt.s32.totalorder %s433, 0
        %s435 = scalar_select %p434, %s433, 0
        %s436 = smul.u32 2, %s435
        %p437 = scmp.lt.s32.totalorder %s27, 1
        %s438 = scalar_select %p437, %s27, 1
        %p439 = scmp.lt.s32.totalorder %s436, 3
        %s440 = scalar_select %p439, %s436, 3
        %s441 = smul.addr %s438, 4
        %s442 = sadd.s32 %s440, %s441
        %s443 = smul.addr %s442, 4
        %s444 = scalar_lea.vmem %s0, %s443
        %s445 = ssub.s32 %s28, 1
        %p446 = scmp.gt.s32.totalorder %s445, 0
        %s447 = scalar_select %p446, %s445, 0
        %s448 = smul.u32 2, %s447
        %s449 = smul.u32 2, %s28
        %p450 = scmp.lt.s32.totalorder %s27, 1
        %s451 = scalar_select %p450, %s27, 1
        %p452 = scmp.lt.s32.totalorder %s449, 3
        %s453 = scalar_select %p452, %s449, 3
        %s454 = smul.addr %s451, 4
        %s455 = sadd.s32 %s453, %s454
        %s456 = smul.addr %s455, 4
        %s457 = scalar_lea.vmem %s1, %s456
        %s458 = smul.u32 2, %s28
        %s459 = sadd.s32 %s28, 1
        %p460 = scmp.lt.s32.totalorder %s459, 1
        %s461 = scalar_select %p460, %s459, 1
        %s462 = smul.u32 2, %s461
        %p463 = scmp.lt.s32.totalorder %s27, 1
        %s464 = scalar_select %p463, %s27, 1
        %p465 = scmp.lt.s32.totalorder %s462, 3
        %s466 = scalar_select %p465, %s462, 3
        %s467 = smul.addr %s464, 4
        %s468 = sadd.s32 %s466, %s467
        %s469 = smul.addr %s468, 4
        %s470 = scalar_lea.vmem %s2, %s469
        %s471 = sadd.s32 %s28, 1
        %p472 = scmp.lt.s32.totalorder %s471, 1
        %s473 = scalar_select %p472, %s471, 1
        %s474 = smul.u32 2, %s473
        %s475 = smul.u32 2, %s28
        %p477 = scmp.gt.s32.totalorder %s28, 0
        %v478 = vld [vmem:[%s444] sm:$0xf]
        %v479 = vld [vmem:[%s444 + $0x4] sm:$0xf]
        %v480 = vld [vmem:[%s3] sm:$0xf]
        %v481 = vld [vmem:[%s3 + $0x4] sm:$0xf]
        %v482 = vld [vmem:[%s3 + $0x8] sm:$0xf]
        %v483 = vld [vmem:[%s3 + $0xc] sm:$0xf]
        %v484 = vld [vmem:[%s6] sm:$0x1]
        %v486 = vperm.slane %v484, 0
        %v490 = vunpack.c.l.b16 %v478
        %v491 = vunpack.c.l.b16 %v479
        %v492 = vpack.c.b16 %v491, %v490
        %v497 = vunpack.c.l.b16 %v480
        %v498 = vunpack.c.l.b16 %v481
        %v499 = vunpack.c.l.b16 %v482
        %v500 = vunpack.c.l.b16 %v483
        %v501 = vpack.c.b16 %v498, %v497
        %v502 = vpack.c.b16 %v500, %v499
        %vm505 = vcmask 261120
        %v507 = vsel %vm505, %v492, 0
        %509 = vmatpush.bf16.msra.mxu0 0
        %510 = vmatpush.bf16.msra.mxu0 0
        %511 = vmatpush.bf16.msra.mxu0 0
        %512 = vmatpush.bf16.msra.mxu0 0
        %513 = vmatpush.bf16.msra.mxu0 0
        %514 = vmatpush.bf16.msra.mxu0 0
        %515 = vmatpush.bf16.msra.mxu0 %v502
        %516 = vmatpush.bf16.msra.mxu0 %v501
        %517 = vmatmul.bf16.gmra.mxu0 %v507
        %v518 = vpop.f32.mrf.mxu0
        %v519 = vadd.f32 %v486, %v518
        %v520 = vpop.f32.mrf.mxu0
        %v521 = vadd.f32 %v486, %v520
        %522 = vdwg.mxu0
        %v523 = vmax.f32 %v519, 0.0
        %v524 = vmax.f32 %v521, 0.0
        %s525 = scalar_select %p477, 1, 0
        %v526 = vstv %s525
        %vm527 = vcmp.eq.s32.totalorder %v526, 1
        %v528 = vsel %vm527, %v523, 0.0
        %v529 = vsel %vm527, %v524, 0.0
        %v530 = vpack.c.bf16 %v528, %v528
        %v531 = vpack.c.bf16 %v529, %v529
        %v532 = vld [vmem:[%s457] sm:$0xf]
        %v533 = vld [vmem:[%s457 + $0x4] sm:$0xf]
        %v536 = vunpack.c.l.b16 %v532
        %v537 = vunpack.c.l.b16 %v533
        %v538 = vpack.c.b16 %v537, %v536
        %v540 = vsel %vm505, %v538, 0
        %542 = vmatpush.bf16.msra.mxu0 0
        %543 = vmatpush.bf16.msra.mxu0 0
        %544 = vmatpush.bf16.msra.mxu0 0
        %545 = vmatpush.bf16.msra.mxu0 0
        %546 = vmatpush.bf16.msra.mxu0 0
        %547 = vmatpush.bf16.msra.mxu0 0
        %548 = vmatpush.bf16.msra.mxu0 %v502
        %549 = vmatpush.bf16.msra.mxu0 %v501
        %550 = vmatmul.bf16.gmra.mxu0 %v540
        %v551 = vpop.f32.mrf.mxu0
        %v552 = vadd.f32 %v486, %v551
        %v553 = vpop.f32.mrf.mxu0
        %v554 = vadd.f32 %v486, %v553
        %555 = vdwg.mxu0
        %v556 = vmax.f32 %v552, 0.0
        %v557 = vmax.f32 %v554, 0.0
        %v558 = vpack.c.bf16 %v556, %v556
        %v559 = vpack.c.bf16 %v557, %v557
        %p560 = scmp.lt.s32.totalorder %s28, 1
        %v561 = vld [vmem:[%s470] sm:$0xf]
        %v562 = vld [vmem:[%s470 + $0x4] sm:$0xf]
        %v565 = vunpack.c.l.b16 %v561
        %v566 = vunpack.c.l.b16 %v562
        %v567 = vpack.c.b16 %v566, %v565
        %v569 = vsel %vm505, %v567, 0
        %571 = vmatpush.bf16.msra.mxu0 0
        %572 = vmatpush.bf16.msra.mxu0 0
        %573 = vmatpush.bf16.msra.mxu0 0
        %574 = vmatpush.bf16.msra.mxu0 0
        %575 = vmatpush.bf16.msra.mxu0 0
        %576 = vmatpush.bf16.msra.mxu0 0
        %577 = vmatpush.bf16.msra.mxu0 %v502
        %578 = vmatpush.bf16.msra.mxu0 %v501
        %579 = vmatmul.bf16.gmra.mxu0 %v569
        %v580 = vpop.f32.mrf.mxu0
        %v581 = vadd.f32 %v486, %v580
        %v582 = vpop.f32.mrf.mxu0
        %v583 = vadd.f32 %v486, %v582
        %584 = vdwg.mxu0
        %v585 = vmax.f32 %v581, 0.0
        %v586 = vmax.f32 %v583, 0.0
        %s587 = scalar_select %p560, 1, 0
        %v588 = vstv %s587
        %vm589 = vcmp.eq.s32.totalorder %v588, 1
        %v590 = vsel %vm589, %v585, 0.0
        %v591 = vsel %vm589, %v586, 0.0
        %v592 = vpack.c.bf16 %v590, %v590
        %v593 = vpack.c.bf16 %v591, %v591
        %v596 = vunpack.c.l.b16 %v530
        %v597 = vunpack.c.l.b16 %v531
        %v598 = vpack.c.b16 %v597, %v596
        %v601 = vunpack.c.l.b16 %v558
        %v602 = vunpack.c.l.b16 %v559
        %v603 = vpack.c.b16 %v602, %v601
        %v606 = vunpack.c.l.b16 %v592
        %v607 = vunpack.c.l.b16 %v593
        %v608 = vpack.c.b16 %v607, %v606
        %v609 = vld [vmem:[%s4] sm:$0xf]
        %s610 = scalar_lea.vmem %s4, 4
        %v611 = vld [vmem:[%s610] sm:$0xf]
        %vm612 = vsmask.f32 5376
        %v614 = vshrl.u32 %v598, 16
        %v616 = vrot.slane %v614, 2
        %v617 = vshll.u32 %v598, 16
        %v619 = vrot.slane %v617, 3
        %v620 = vor.u32 %v616, %v619
        %v622 = vshrl.u32 %v603, 16
        %v624 = vrot.slane %v622, 2
        %v625 = vshll.u32 %v603, 16
        %v627 = vrot.slane %v625, 3
        %v628 = vor.u32 %v624, %v627
        %v629 = vsel %vm612, %v620, %v628
        %vm630 = vcmask 64512
        %v632 = vsel %vm630, %v629, 0
        %vm634 = vcmask 1043456
        %v636 = vsel %vm634, %v611, 0
        %638 = vmatpush.bf16.msra.mxu0 0
        %639 = vmatpush.bf16.msra.mxu0 0
        %640 = vmatpush.bf16.msra.mxu0 0
        %641 = vmatpush.bf16.msra.mxu0 0
        %642 = vmatpush.bf16.msra.mxu0 0
        %643 = vmatpush.bf16.msra.mxu0 0
        %644 = vmatpush.bf16.msra.mxu0 0
        %645 = vmatpush.bf16.msra.mxu0 %v636
        %646 = vmatmul.bf16.gmra.mxu0 %v632
        %v647 = vpop.f32.mrf.mxu0
        %v648 = vadd.f32 0.0, %v647
        %v649 = vpop.f32.mrf.mxu0
        %v650 = vadd.f32 0.0, %v649
        %651 = vdwg.mxu0
        %vm652 = vcmask 1045504
        %v653 = vrot.slane %v598, 2
        %v654 = vrot.slane %v603, 2
        %v655 = vsel %vm652, %v653, %v654
        %v657 = vsel %vm630, %v655, 0
        %v660 = vsel %vm634, %v609, 0
        %662 = vmatpush.bf16.msra.mxu0 0
        %663 = vmatpush.bf16.msra.mxu0 0
        %664 = vmatpush.bf16.msra.mxu0 0
        %665 = vmatpush.bf16.msra.mxu0 0
        %666 = vmatpush.bf16.msra.mxu0 0
        %667 = vmatpush.bf16.msra.mxu0 0
        %668 = vmatpush.bf16.msra.mxu0 0
        %669 = vmatpush.bf16.msra.mxu0 %v660
        %670 = vmatmul.bf16.gmra.mxu0 %v657
        %v671 = vpop.f32.mrf.mxu0
        %v672 = vadd.f32 %v648, %v671
        %v673 = vpop.f32.mrf.mxu0
        %v674 = vadd.f32 %v650, %v673
        %675 = vdwg.mxu0
        %s676 = scalar_lea.vmem %s4, 8
        %v677 = vld [vmem:[%s676] sm:$0xf]
        %vm678 = vcmask 1044480
        %v679 = vrot.slane %v598, 3
        %v680 = vrot.slane %v603, 3
        %v681 = vsel %vm678, %v679, %v680
        %v683 = vsel %vm630, %v681, 0
        %v686 = vsel %vm634, %v677, 0
        %688 = vmatpush.bf16.msra.mxu0 0
        %689 = vmatpush.bf16.msra.mxu0 0
        %690 = vmatpush.bf16.msra.mxu0 0
        %691 = vmatpush.bf16.msra.mxu0 0
        %692 = vmatpush.bf16.msra.mxu0 0
        %693 = vmatpush.bf16.msra.mxu0 0
        %694 = vmatpush.bf16.msra.mxu0 0
        %695 = vmatpush.bf16.msra.mxu0 %v686
        %696 = vmatmul.bf16.gmra.mxu0 %v683
        %v697 = vpop.f32.mrf.mxu0
        %v698 = vadd.f32 0.0, %v697
        %v699 = vpop.f32.mrf.mxu0
        %v700 = vadd.f32 0.0, %v699
        %701 = vdwg.mxu0
        %v702 = vadd.f32 %v672, %v698
        %v703 = vadd.f32 %v674, %v700
        %s704 = scalar_lea.vmem %s4, 12
        %v705 = vld [vmem:[%s704] sm:$0xf]
        %vm706 = vsmask.f32 4352
        %v707 = vrot.slane %v614, 3
        %v708 = vrot.slane %v617, 4
        %v709 = vor.u32 %v707, %v708
        %v710 = vrot.slane %v622, 3
        %v711 = vrot.slane %v625, 4
        %v712 = vor.u32 %v710, %v711
        %v713 = vsel %vm706, %v709, %v712
        %v715 = vsel %vm630, %v713, 0
        %v718 = vsel %vm634, %v705, 0
        %720 = vmatpush.bf16.msra.mxu0 0
        %721 = vmatpush.bf16.msra.mxu0 0
        %722 = vmatpush.bf16.msra.mxu0 0
        %723 = vmatpush.bf16.msra.mxu0 0
        %724 = vmatpush.bf16.msra.mxu0 0
        %725 = vmatpush.bf16.msra.mxu0 0
        %726 = vmatpush.bf16.msra.mxu0 0
        %727 = vmatpush.bf16.msra.mxu0 %v718
        %728 = vmatmul.bf16.gmra.mxu0 %v715
        %v729 = vpop.f32.mrf.mxu0
        %v730 = vadd.f32 0.0, %v729
        %v731 = vpop.f32.mrf.mxu0
        %v732 = vadd.f32 0.0, %v731
        %733 = vdwg.mxu0
        %v734 = vadd.f32 %v702, %v730
        %v735 = vadd.f32 %v703, %v732
        %s736 = scalar_lea.vmem %s4, 16
        %v737 = vld [vmem:[%s736] sm:$0xf]
        %vm738 = vcmask 1043456
        %v739 = vrot.slane %v598, 4
        %v740 = vrot.slane %v603, 4
        %v741 = vsel %vm738, %v739, %v740
        %v743 = vsel %vm630, %v741, 0
        %v746 = vsel %vm634, %v737, 0
        %748 = vmatpush.bf16.msra.mxu0 0
        %749 = vmatpush.bf16.msra.mxu0 0
        %750 = vmatpush.bf16.msra.mxu0 0
        %751 = vmatpush.bf16.msra.mxu0 0
        %752 = vmatpush.bf16.msra.mxu0 0
        %753 = vmatpush.bf16.msra.mxu0 0
        %754 = vmatpush.bf16.msra.mxu0 0
        %755 = vmatpush.bf16.msra.mxu0 %v746
        %756 = vmatmul.bf16.gmra.mxu0 %v743
        %v757 = vpop.f32.mrf.mxu0
        %v758 = vadd.f32 0.0, %v757
        %v759 = vpop.f32.mrf.mxu0
        %v760 = vadd.f32 0.0, %v759
        %761 = vdwg.mxu0
        %v762 = vadd.f32 %v734, %v758
        %v763 = vadd.f32 %v735, %v760
        %s764 = scalar_lea.vmem %s4, 20
        %v765 = vld [vmem:[%s764] sm:$0xf]
        %vm766 = vsmask.f32 3328
        %v767 = vrot.slane %v614, 4
        %v768 = vrot.slane %v617, 5
        %v769 = vor.u32 %v767, %v768
        %v770 = vrot.slane %v622, 4
        %v771 = vrot.slane %v625, 5
        %v772 = vor.u32 %v770, %v771
        %v773 = vsel %vm766, %v769, %v772
        %v775 = vsel %vm630, %v773, 0
        %v778 = vsel %vm634, %v765, 0
        %780 = vmatpush.bf16.msra.mxu0 0
        %781 = vmatpush.bf16.msra.mxu0 0
        %782 = vmatpush.bf16.msra.mxu0 0
        %783 = vmatpush.bf16.msra.mxu0 0
        %784 = vmatpush.bf16.msra.mxu0 0
        %785 = vmatpush.bf16.msra.mxu0 0
        %786 = vmatpush.bf16.msra.mxu0 0
        %787 = vmatpush.bf16.msra.mxu0 %v778
        %788 = vmatmul.bf16.gmra.mxu0 %v775
        %v789 = vpop.f32.mrf.mxu0
        %v790 = vadd.f32 0.0, %v789
        %v791 = vpop.f32.mrf.mxu0
        %v792 = vadd.f32 0.0, %v791
        %793 = vdwg.mxu0
        %v794 = vadd.f32 %v762, %v790
        %v795 = vadd.f32 %v763, %v792
        %s796 = scalar_lea.vmem %s4, 24
        %v797 = vld [vmem:[%s796] sm:$0xf]
        %vm798 = vcmask 1042432
        %v799 = vrot.slane %v598, 5
        %v800 = vrot.slane %v603, 5
        %v801 = vsel %vm798, %v799, %v800
        %v803 = vsel %vm630, %v801, 0
        %v806 = vsel %vm634, %v797, 0
        %808 = vmatpush.bf16.msra.mxu0 0
        %809 = vmatpush.bf16.msra.mxu0 0
        %810 = vmatpush.bf16.msra.mxu0 0
        %811 = vmatpush.bf16.msra.mxu0 0
        %812 = vmatpush.bf16.msra.mxu0 0
        %813 = vmatpush.bf16.msra.mxu0 0
        %814 = vmatpush.bf16.msra.mxu0 0
        %815 = vmatpush.bf16.msra.mxu0 %v806
        %816 = vmatmul.bf16.gmra.mxu0 %v803
        %v817 = vpop.f32.mrf.mxu0
        %v818 = vadd.f32 0.0, %v817
        %v819 = vpop.f32.mrf.mxu0
        %v820 = vadd.f32 0.0, %v819
        %821 = vdwg.mxu0
        %v822 = vadd.f32 %v794, %v818
        %v823 = vadd.f32 %v795, %v820
        %s824 = scalar_lea.vmem %s4, 28
        %v825 = vld [vmem:[%s824] sm:$0xf]
        %vm826 = vsmask.f32 2304
        %v827 = vrot.slane %v614, 5
        %v828 = vrot.slane %v617, 6
        %v829 = vor.u32 %v827, %v828
        %v830 = vrot.slane %v622, 5
        %v831 = vrot.slane %v625, 6
        %v832 = vor.u32 %v830, %v831
        %v833 = vsel %vm826, %v829, %v832
        %v835 = vsel %vm630, %v833, 0
        %v838 = vsel %vm634, %v825, 0
        %840 = vmatpush.bf16.msra.mxu0 0
        %841 = vmatpush.bf16.msra.mxu0 0
        %842 = vmatpush.bf16.msra.mxu0 0
        %843 = vmatpush.bf16.msra.mxu0 0
        %844 = vmatpush.bf16.msra.mxu0 0
        %845 = vmatpush.bf16.msra.mxu0 0
        %846 = vmatpush.bf16.msra.mxu0 0
        %847 = vmatpush.bf16.msra.mxu0 %v838
        %848 = vmatmul.bf16.gmra.mxu0 %v835
        %v849 = vpop.f32.mrf.mxu0
        %v850 = vadd.f32 0.0, %v849
        %v851 = vpop.f32.mrf.mxu0
        %v852 = vadd.f32 0.0, %v851
        %853 = vdwg.mxu0
        %v854 = vadd.f32 %v822, %v850
        %v855 = vadd.f32 %v823, %v852
        %s856 = scalar_lea.vmem %s4, 32
        %v857 = vld [vmem:[%s856] sm:$0xf]
        %vm858 = vcmask 1041408
        %v859 = vrot.slane %v598, 6
        %v860 = vrot.slane %v603, 6
        %v861 = vsel %vm858, %v859, %v860
        %v863 = vsel %vm630, %v861, 0
        %v866 = vsel %vm634, %v857, 0
        %868 = vmatpush.bf16.msra.mxu0 0
        %869 = vmatpush.bf16.msra.mxu0 0
        %870 = vmatpush.bf16.msra.mxu0 0
        %871 = vmatpush.bf16.msra.mxu0 0
        %872 = vmatpush.bf16.msra.mxu0 0
        %873 = vmatpush.bf16.msra.mxu0 0
        %874 = vmatpush.bf16.msra.mxu0 0
        %875 = vmatpush.bf16.msra.mxu0 %v866
        %876 = vmatmul.bf16.gmra.mxu0 %v863
        %v877 = vpop.f32.mrf.mxu0
        %v878 = vadd.f32 0.0, %v877
        %v879 = vpop.f32.mrf.mxu0
        %v880 = vadd.f32 0.0, %v879
        %881 = vdwg.mxu0
        %v882 = vadd.f32 %v854, %v878
        %v883 = vadd.f32 %v855, %v880
        %s884 = scalar_lea.vmem %s4, 36
        %v885 = vld [vmem:[%s884] sm:$0xf]
        %vm886 = vsmask.f32 1280
        %v887 = vrot.slane %v614, 6
        %v888 = vrot.slane %v617, 7
        %v889 = vor.u32 %v887, %v888
        %v890 = vrot.slane %v622, 6
        %v891 = vrot.slane %v625, 7
        %v892 = vor.u32 %v890, %v891
        %v893 = vsel %vm886, %v889, %v892
        %v895 = vsel %vm630, %v893, 0
        %v898 = vsel %vm634, %v885, 0
        %900 = vmatpush.bf16.msra.mxu0 0
        %901 = vmatpush.bf16.msra.mxu0 0
        %902 = vmatpush.bf16.msra.mxu0 0
        %903 = vmatpush.bf16.msra.mxu0 0
        %904 = vmatpush.bf16.msra.mxu0 0
        %905 = vmatpush.bf16.msra.mxu0 0
        %906 = vmatpush.bf16.msra.mxu0 0
        %907 = vmatpush.bf16.msra.mxu0 %v898
        %908 = vmatmul.bf16.gmra.mxu0 %v895
        %v909 = vpop.f32.mrf.mxu0
        %v910 = vadd.f32 0.0, %v909
        %v911 = vpop.f32.mrf.mxu0
        %v912 = vadd.f32 0.0, %v911
        %913 = vdwg.mxu0
        %v914 = vadd.f32 %v882, %v910
        %v915 = vadd.f32 %v883, %v912
        %s916 = scalar_lea.vmem %s4, 40
        %v917 = vld [vmem:[%s916] sm:$0xf]
        %vm918 = vcmask 1040384
        %v919 = vrot.slane %v598, 7
        %v920 = vrot.slane %v603, 7
        %v921 = vsel %vm918, %v919, %v920
        %v923 = vsel %vm630, %v921, 0
        %v926 = vsel %vm634, %v917, 0
        %928 = vmatpush.bf16.msra.mxu0 0
        %929 = vmatpush.bf16.msra.mxu0 0
        %930 = vmatpush.bf16.msra.mxu0 0
        %931 = vmatpush.bf16.msra.mxu0 0
        %932 = vmatpush.bf16.msra.mxu0 0
        %933 = vmatpush.bf16.msra.mxu0 0
        %934 = vmatpush.bf16.msra.mxu0 0
        %935 = vmatpush.bf16.msra.mxu0 %v926
        %936 = vmatmul.bf16.gmra.mxu0 %v923
        %v937 = vpop.f32.mrf.mxu0
        %v938 = vadd.f32 0.0, %v937
        %v939 = vpop.f32.mrf.mxu0
        %v940 = vadd.f32 0.0, %v939
        %941 = vdwg.mxu0
        %v942 = vadd.f32 %v914, %v938
        %v943 = vadd.f32 %v915, %v940
        %s944 = scalar_lea.vmem %s4, 44
        %v945 = vld [vmem:[%s944] sm:$0xf]
        %vm946 = vsmask.f32 256
        %v947 = vrot.slane %v614, 7
        %v948 = vrot.slane %v622, 7
        %v949 = vor.u32 %v948, %v625
        %v950 = vsel %vm946, %v947, %v949
        %v952 = vsel %vm630, %v950, 0
        %v955 = vsel %vm634, %v945, 0
        %957 = vmatpush.bf16.msra.mxu0 0
        %958 = vmatpush.bf16.msra.mxu0 0
        %959 = vmatpush.bf16.msra.mxu0 0
        %960 = vmatpush.bf16.msra.mxu0 0
        %961 = vmatpush.bf16.msra.mxu0 0
        %962 = vmatpush.bf16.msra.mxu0 0
        %963 = vmatpush.bf16.msra.mxu0 0
        %964 = vmatpush.bf16.msra.mxu0 %v955
        %965 = vmatmul.bf16.gmra.mxu0 %v952
        %v966 = vpop.f32.mrf.mxu0
        %v967 = vadd.f32 0.0, %v966
        %v968 = vpop.f32.mrf.mxu0
        %v969 = vadd.f32 0.0, %v968
        %970 = vdwg.mxu0
        %v971 = vadd.f32 %v942, %v967
        %v972 = vadd.f32 %v943, %v969
        %s973 = scalar_lea.vmem %s4, 48
        %v974 = vld [vmem:[%s973] sm:$0xf]
        %v975 = vsel %vm630, %v603, 0
        %v978 = vsel %vm634, %v974, 0
        %980 = vmatpush.bf16.msra.mxu0 0
        %981 = vmatpush.bf16.msra.mxu0 0
        %982 = vmatpush.bf16.msra.mxu0 0
        %983 = vmatpush.bf16.msra.mxu0 0
        %984 = vmatpush.bf16.msra.mxu0 0
        %985 = vmatpush.bf16.msra.mxu0 0
        %986 = vmatpush.bf16.msra.mxu0 0
        %987 = vmatpush.bf16.msra.mxu0 %v978
        %988 = vmatmul.bf16.gmra.mxu0 %v975
        %v989 = vpop.f32.mrf.mxu0
        %v990 = vadd.f32 0.0, %v989
        %v991 = vpop.f32.mrf.mxu0
        %v992 = vadd.f32 0.0, %v991
        %993 = vdwg.mxu0
        %v994 = vadd.f32 %v971, %v990
        %v995 = vadd.f32 %v972, %v992
        %s996 = scalar_lea.vmem %s4, 52
        %v997 = vld [vmem:[%s996] sm:$0xf]
        %vm998 = vsmask.f32 7424
        %v999 = vrot.slane %v625, 1
        %v1000 = vor.u32 %v622, %v999
        %v1002 = vshll.u32 %v608, 16
        %v1004 = vrot.slane %v1002, 1
        %v1005 = vsel %vm998, %v1000, %v1004
        %v1007 = vsel %vm630, %v1005, 0
        %v1010 = vsel %vm634, %v997, 0
        %1012 = vmatpush.bf16.msra.mxu0 0
        %1013 = vmatpush.bf16.msra.mxu0 0
        %1014 = vmatpush.bf16.msra.mxu0 0
        %1015 = vmatpush.bf16.msra.mxu0 0
        %1016 = vmatpush.bf16.msra.mxu0 0
        %1017 = vmatpush.bf16.msra.mxu0 0
        %1018 = vmatpush.bf16.msra.mxu0 0
        %1019 = vmatpush.bf16.msra.mxu0 %v1010
        %1020 = vmatmul.bf16.gmra.mxu0 %v1007
        %v1021 = vpop.f32.mrf.mxu0
        %v1022 = vadd.f32 0.0, %v1021
        %v1023 = vpop.f32.mrf.mxu0
        %v1024 = vadd.f32 0.0, %v1023
        %1025 = vdwg.mxu0
        %v1026 = vadd.f32 %v994, %v1022
        %v1027 = vadd.f32 %v995, %v1024
        %s1028 = scalar_lea.vmem %s4, 56
        %v1029 = vld [vmem:[%s1028] sm:$0xf]
        %vm1030 = vcmask 1046528
        %v1031 = vrot.slane %v603, 1
        %v1032 = vrot.slane %v608, 1
        %v1033 = vsel %vm1030, %v1031, %v1032
        %v1035 = vsel %vm630, %v1033, 0
        %v1038 = vsel %vm634, %v1029, 0
        %1040 = vmatpush.bf16.msra.mxu0 0
        %1041 = vmatpush.bf16.msra.mxu0 0
        %1042 = vmatpush.bf16.msra.mxu0 0
        %1043 = vmatpush.bf16.msra.mxu0 0
        %1044 = vmatpush.bf16.msra.mxu0 0
        %1045 = vmatpush.bf16.msra.mxu0 0
        %1046 = vmatpush.bf16.msra.mxu0 0
        %1047 = vmatpush.bf16.msra.mxu0 %v1038
        %1048 = vmatmul.bf16.gmra.mxu0 %v1035
        %v1049 = vpop.f32.mrf.mxu0
        %v1050 = vadd.f32 0.0, %v1049
        %v1051 = vpop.f32.mrf.mxu0
        %v1052 = vadd.f32 0.0, %v1051
        %1053 = vdwg.mxu0
        %v1054 = vadd.f32 %v1026, %v1050
        %v1055 = vadd.f32 %v1027, %v1052
        %s1056 = scalar_lea.vmem %s4, 60
        %v1057 = vld [vmem:[%s1056] sm:$0xf]
        %vm1058 = vsmask.f32 6400
        %v1059 = vrot.slane %v622, 1
        %v1060 = vrot.slane %v625, 2
        %v1061 = vor.u32 %v1059, %v1060
        %v1062 = vshrl.u32 %v608, 16
        %v1064 = vrot.slane %v1062, 1
        %v1065 = vrot.slane %v1002, 2
        %v1066 = vor.u32 %v1064, %v1065
        %v1067 = vsel %vm1058, %v1061, %v1066
        %v1069 = vsel %vm630, %v1067, 0
        %v1072 = vsel %vm634, %v1057, 0
        %1074 = vmatpush.bf16.msra.mxu0 0
        %1075 = vmatpush.bf16.msra.mxu0 0
        %1076 = vmatpush.bf16.msra.mxu0 0
        %1077 = vmatpush.bf16.msra.mxu0 0
        %1078 = vmatpush.bf16.msra.mxu0 0
        %1079 = vmatpush.bf16.msra.mxu0 0
        %1080 = vmatpush.bf16.msra.mxu0 0
        %1081 = vmatpush.bf16.msra.mxu0 %v1072
        %1082 = vmatmul.bf16.gmra.mxu0 %v1069
        %v1083 = vpop.f32.mrf.mxu0
        %v1084 = vadd.f32 0.0, %v1083
        %v1085 = vpop.f32.mrf.mxu0
        %v1086 = vadd.f32 0.0, %v1085
        %1087 = vdwg.mxu0
        %v1088 = vadd.f32 %v1054, %v1084
        %v1089 = vadd.f32 %v1055, %v1086
        %s1090 = scalar_lea.vmem %s4, 64
        %v1091 = vld [vmem:[%s1090] sm:$0xf]
        %v1092 = vrot.slane %v608, 2
        %v1093 = vsel %vm652, %v654, %v1092
        %v1095 = vsel %vm630, %v1093, 0
        %v1098 = vsel %vm634, %v1091, 0
        %1100 = vmatpush.bf16.msra.mxu0 0
        %1101 = vmatpush.bf16.msra.mxu0 0
        %1102 = vmatpush.bf16.msra.mxu0 0
        %1103 = vmatpush.bf16.msra.mxu0 0
        %1104 = vmatpush.bf16.msra.mxu0 0
        %1105 = vmatpush.bf16.msra.mxu0 0
        %1106 = vmatpush.bf16.msra.mxu0 0
        %1107 = vmatpush.bf16.msra.mxu0 %v1098
        %1108 = vmatmul.bf16.gmra.mxu0 %v1095
        %v1109 = vpop.f32.mrf.mxu0
        %v1110 = vadd.f32 0.0, %v1109
        %v1111 = vpop.f32.mrf.mxu0
        %v1112 = vadd.f32 0.0, %v1111
        %1113 = vdwg.mxu0
        %v1114 = vadd.f32 %v1088, %v1110
        %v1115 = vadd.f32 %v1089, %v1112
        %s1116 = scalar_lea.vmem %s4, 68
        %v1117 = vld [vmem:[%s1116] sm:$0xf]
        %v1118 = vrot.slane %v1062, 2
        %v1119 = vrot.slane %v1002, 3
        %v1120 = vor.u32 %v1118, %v1119
        %v1121 = vsel %vm612, %v628, %v1120
        %v1123 = vsel %vm630, %v1121, 0
        %v1126 = vsel %vm634, %v1117, 0
        %1128 = vmatpush.bf16.msra.mxu0 0
        %1129 = vmatpush.bf16.msra.mxu0 0
        %1130 = vmatpush.bf16.msra.mxu0 0
        %1131 = vmatpush.bf16.msra.mxu0 0
        %1132 = vmatpush.bf16.msra.mxu0 0
        %1133 = vmatpush.bf16.msra.mxu0 0
        %1134 = vmatpush.bf16.msra.mxu0 0
        %1135 = vmatpush.bf16.msra.mxu0 %v1126
        %1136 = vmatmul.bf16.gmra.mxu0 %v1123
        %v1137 = vpop.f32.mrf.mxu0
        %v1138 = vadd.f32 0.0, %v1137
        %v1139 = vpop.f32.mrf.mxu0
        %v1140 = vadd.f32 0.0, %v1139
        %1141 = vdwg.mxu0
        %v1142 = vadd.f32 %v1114, %v1138
        %v1143 = vadd.f32 %v1115, %v1140
        %s1144 = scalar_lea.vmem %s4, 72
        %v1145 = vld [vmem:[%s1144] sm:$0xf]
        %v1146 = vrot.slane %v608, 3
        %v1147 = vsel %vm678, %v680, %v1146
        %v1149 = vsel %vm630, %v1147, 0
        %v1152 = vsel %vm634, %v1145, 0
        %1154 = vmatpush.bf16.msra.mxu0 0
        %1155 = vmatpush.bf16.msra.mxu0 0
        %1156 = vmatpush.bf16.msra.mxu0 0
        %1157 = vmatpush.bf16.msra.mxu0 0
        %1158 = vmatpush.bf16.msra.mxu0 0
        %1159 = vmatpush.bf16.msra.mxu0 0
        %1160 = vmatpush.bf16.msra.mxu0 0
        %1161 = vmatpush.bf16.msra.mxu0 %v1152
        %1162 = vmatmul.bf16.gmra.mxu0 %v1149
        %v1163 = vpop.f32.mrf.mxu0
        %v1164 = vadd.f32 0.0, %v1163
        %v1165 = vpop.f32.mrf.mxu0
        %v1166 = vadd.f32 0.0, %v1165
        %1167 = vdwg.mxu0
        %v1168 = vadd.f32 %v1142, %v1164
        %v1169 = vadd.f32 %v1143, %v1166
        %s1170 = scalar_lea.vmem %s4, 76
        %v1171 = vld [vmem:[%s1170] sm:$0xf]
        %v1172 = vrot.slane %v1062, 3
        %v1173 = vrot.slane %v1002, 4
        %v1174 = vor.u32 %v1172, %v1173
        %v1175 = vsel %vm706, %v712, %v1174
        %v1177 = vsel %vm630, %v1175, 0
        %v1180 = vsel %vm634, %v1171, 0
        %1182 = vmatpush.bf16.msra.mxu0 0
        %1183 = vmatpush.bf16.msra.mxu0 0
        %1184 = vmatpush.bf16.msra.mxu0 0
        %1185 = vmatpush.bf16.msra.mxu0 0
        %1186 = vmatpush.bf16.msra.mxu0 0
        %1187 = vmatpush.bf16.msra.mxu0 0
        %1188 = vmatpush.bf16.msra.mxu0 0
        %1189 = vmatpush.bf16.msra.mxu0 %v1180
        %1190 = vmatmul.bf16.gmra.mxu0 %v1177
        %v1191 = vpop.f32.mrf.mxu0
        %v1192 = vadd.f32 0.0, %v1191
        %v1193 = vpop.f32.mrf.mxu0
        %v1194 = vadd.f32 0.0, %v1193
        %1195 = vdwg.mxu0
        %v1196 = vadd.f32 %v1168, %v1192
        %v1197 = vadd.f32 %v1169, %v1194
        %s1198 = scalar_lea.vmem %s4, 80
        %v1199 = vld [vmem:[%s1198] sm:$0xf]
        %v1200 = vrot.slane %v608, 4
        %v1201 = vsel %vm738, %v740, %v1200
        %v1203 = vsel %vm630, %v1201, 0
        %v1206 = vsel %vm634, %v1199, 0
        %1208 = vmatpush.bf16.msra.mxu0 0
        %1209 = vmatpush.bf16.msra.mxu0 0
        %1210 = vmatpush.bf16.msra.mxu0 0
        %1211 = vmatpush.bf16.msra.mxu0 0
        %1212 = vmatpush.bf16.msra.mxu0 0
        %1213 = vmatpush.bf16.msra.mxu0 0
        %1214 = vmatpush.bf16.msra.mxu0 0
        %1215 = vmatpush.bf16.msra.mxu0 %v1206
        %1216 = vmatmul.bf16.gmra.mxu0 %v1203
        %v1217 = vpop.f32.mrf.mxu0
        %v1218 = vadd.f32 0.0, %v1217
        %v1219 = vpop.f32.mrf.mxu0
        %v1220 = vadd.f32 0.0, %v1219
        %1221 = vdwg.mxu0
        %v1222 = vadd.f32 %v1196, %v1218
        %v1223 = vadd.f32 %v1197, %v1220
        %s1224 = scalar_lea.vmem %s4, 84
        %v1225 = vld [vmem:[%s1224] sm:$0xf]
        %v1226 = vrot.slane %v1062, 4
        %v1227 = vrot.slane %v1002, 5
        %v1228 = vor.u32 %v1226, %v1227
        %v1229 = vsel %vm766, %v772, %v1228
        %v1231 = vsel %vm630, %v1229, 0
        %v1234 = vsel %vm634, %v1225, 0
        %1236 = vmatpush.bf16.msra.mxu0 0
        %1237 = vmatpush.bf16.msra.mxu0 0
        %1238 = vmatpush.bf16.msra.mxu0 0
        %1239 = vmatpush.bf16.msra.mxu0 0
        %1240 = vmatpush.bf16.msra.mxu0 0
        %1241 = vmatpush.bf16.msra.mxu0 0
        %1242 = vmatpush.bf16.msra.mxu0 0
        %1243 = vmatpush.bf16.msra.mxu0 %v1234
        %1244 = vmatmul.bf16.gmra.mxu0 %v1231
        %v1245 = vpop.f32.mrf.mxu0
        %v1246 = vadd.f32 0.0, %v1245
        %v1247 = vpop.f32.mrf.mxu0
        %v1248 = vadd.f32 0.0, %v1247
        %1249 = vdwg.mxu0
        %v1250 = vadd.f32 %v1222, %v1246
        %v1251 = vadd.f32 %v1223, %v1248
        %s1252 = scalar_lea.vmem %s4, 88
        %v1253 = vld [vmem:[%s1252] sm:$0xf]
        %v1254 = vrot.slane %v608, 5
        %v1255 = vsel %vm798, %v800, %v1254
        %v1257 = vsel %vm630, %v1255, 0
        %v1260 = vsel %vm634, %v1253, 0
        %1262 = vmatpush.bf16.msra.mxu0 0
        %1263 = vmatpush.bf16.msra.mxu0 0
        %1264 = vmatpush.bf16.msra.mxu0 0
        %1265 = vmatpush.bf16.msra.mxu0 0
        %1266 = vmatpush.bf16.msra.mxu0 0
        %1267 = vmatpush.bf16.msra.mxu0 0
        %1268 = vmatpush.bf16.msra.mxu0 0
        %1269 = vmatpush.bf16.msra.mxu0 %v1260
        %1270 = vmatmul.bf16.gmra.mxu0 %v1257
        %v1271 = vpop.f32.mrf.mxu0
        %v1272 = vadd.f32 0.0, %v1271
        %v1273 = vpop.f32.mrf.mxu0
        %v1274 = vadd.f32 0.0, %v1273
        %1275 = vdwg.mxu0
        %v1276 = vadd.f32 %v1250, %v1272
        %v1277 = vadd.f32 %v1251, %v1274
        %s1278 = scalar_lea.vmem %s4, 92
        %v1279 = vld [vmem:[%s1278] sm:$0xf]
        %v1280 = vrot.slane %v1062, 5
        %v1281 = vrot.slane %v1002, 6
        %v1282 = vor.u32 %v1280, %v1281
        %v1283 = vsel %vm826, %v832, %v1282
        %v1285 = vsel %vm630, %v1283, 0
        %v1288 = vsel %vm634, %v1279, 0
        %1290 = vmatpush.bf16.msra.mxu0 0
        %1291 = vmatpush.bf16.msra.mxu0 0
        %1292 = vmatpush.bf16.msra.mxu0 0
        %1293 = vmatpush.bf16.msra.mxu0 0
        %1294 = vmatpush.bf16.msra.mxu0 0
        %1295 = vmatpush.bf16.msra.mxu0 0
        %1296 = vmatpush.bf16.msra.mxu0 0
        %1297 = vmatpush.bf16.msra.mxu0 %v1288
        %1298 = vmatmul.bf16.gmra.mxu0 %v1285
        %v1299 = vpop.f32.mrf.mxu0
        %v1300 = vadd.f32 0.0, %v1299
        %v1301 = vpop.f32.mrf.mxu0
        %v1302 = vadd.f32 0.0, %v1301
        %1303 = vdwg.mxu0
        %v1304 = vadd.f32 %v1276, %v1300
        %v1305 = vadd.f32 %v1277, %v1302
        %s1306 = scalar_lea.vmem %s4, 96
        %v1307 = vld [vmem:[%s1306] sm:$0xf]
        %v1308 = vrot.slane %v608, 6
        %v1309 = vsel %vm858, %v860, %v1308
        %v1311 = vsel %vm630, %v1309, 0
        %v1314 = vsel %vm634, %v1307, 0
        %1316 = vmatpush.bf16.msra.mxu0 0
        %1317 = vmatpush.bf16.msra.mxu0 0
        %1318 = vmatpush.bf16.msra.mxu0 0
        %1319 = vmatpush.bf16.msra.mxu0 0
        %1320 = vmatpush.bf16.msra.mxu0 0
        %1321 = vmatpush.bf16.msra.mxu0 0
        %1322 = vmatpush.bf16.msra.mxu0 0
        %1323 = vmatpush.bf16.msra.mxu0 %v1314
        %1324 = vmatmul.bf16.gmra.mxu0 %v1311
        %v1325 = vpop.f32.mrf.mxu0
        %v1326 = vadd.f32 0.0, %v1325
        %v1327 = vpop.f32.mrf.mxu0
        %v1328 = vadd.f32 0.0, %v1327
        %1329 = vdwg.mxu0
        %v1330 = vadd.f32 %v1304, %v1326
        %v1331 = vadd.f32 %v1305, %v1328
        %v1332 = vld [vmem:[%s7] sm:$0x1]
        %v1334 = vperm.slane %v1332, 0
        %v1336 = vadd.f32 %v1330, %v1334
        %v1337 = vadd.f32 %v1331, %v1334
        %v1338 = vmax.f32 %v1336, 0.0
        %v1339 = vmax.f32 %v1337, 0.0
        %v1340 = vpack.c.bf16 %v1339, %v1338
        %v1341 = vld [vmem:[%s5] sm:$0xf]
        %v1342 = vld [vmem:[%s8] sm:$0x1]
        %v1344 = vperm.slane %v1342, 0
        %v1347 = vsel %vm630, %v1340, 0
        %v1350 = vsel %vm634, %v1341, 0
        %1352 = vmatpush.bf16.msra.mxu0 0
        %1353 = vmatpush.bf16.msra.mxu0 0
        %1354 = vmatpush.bf16.msra.mxu0 0
        %1355 = vmatpush.bf16.msra.mxu0 0
        %1356 = vmatpush.bf16.msra.mxu0 0
        %1357 = vmatpush.bf16.msra.mxu0 0
        %1358 = vmatpush.bf16.msra.mxu0 0
        %1359 = vmatpush.bf16.msra.mxu0 %v1350
        %1360 = vmatmul.bf16.gmra.mxu0 %v1347
        %v1361 = vpop.f32.mrf.mxu0
        %v1362 = vadd.f32 %v1344, %v1361
        %v1363 = vpop.f32.mrf.mxu0
        %v1364 = vadd.f32 %v1344, %v1363
        %1365 = vdwg.mxu0
        %v1366 = vunpack.c.l.bf16 %v532
        %v1367 = vunpack.c.l.bf16 %v533
        %v1368 = vadd.f32 %v1362, %v1366
        %v1369 = vadd.f32 %v1364, %v1367
        %v1370 = vmax.f32 %v1368, 0.0
        %v1371 = vmax.f32 %v1369, 0.0
        %v1372 = vpack.c.bf16 %v1370, %v1370
        %v1373 = vpack.c.bf16 %v1371, %v1371
        %vm1374 = vcmask 257024
        %1375 = vst.msk [vmem:[%s432] sm:$0xf] %vm1374, %v1372
        %1376 = vst.msk [vmem:[%s432 + $0x4] sm:$0xf] %vm1374, %v1373
        %s1377 = sand.u32 %s267, 1
        %s1378 = scalar_lea.sflag [#allocation3], %s1377
        %s1379 = sand.u32 %s267, 1
        %s1380 = smul.addr %s1379, 8
        %s1381 = scalar_lea.vmem [#allocation2], %s1380
        // Predicated region
        $region57: #{tpu_custom_call.1} parent=55 // pred_check
          %p1382 = pneg %p277
        $region58: #{tpu_custom_call.1} parent=55 // pred_check_branch
          %1384 = sbr.rel (%p1382) target = $region60
        $region59: #{tpu_custom_call.1} parent=55 // pred_region
          %s1385 = smul.u32 2, %s28
          %1387 = vsyncadd %s1378, 0
          %s1388 = smul.addr %s27, 4
          %s1389 = sadd.s32 %s1385, %s1388
          %s1390 = smul.addr %s1389, 4
          %s1391 = scalar_lea.hbm %s9, %s1390
          %s1392 = sshll.u32 %s1381, 4
          %s1393 = int_to_ptr.vmem [resolvable:$true] %s1392
          %s1394 = sshll.u32 %s1391, 4
          %s1395 = int_to_ptr.hbm [resolvable:$true] %s1394
          %1400 = dma.vmem_to_hbm [thread:$0]  %s1393, 128, %s1395, %s1378, 64, 64, 4
        $region60: #{tpu_custom_call.1} parent=55 // pred_fallthru
          _
      $region56: #{tpu_custom_call.1} parent=5 // pred_fallthru
        _
      %p1401 = scmp.le.s32.totalorder 2, %s18
      // Predicated region
      $region61: #{tpu_custom_call.1} parent=5 // pred_check
        %p1402 = pneg %p1401
      $region62: #{tpu_custom_call.1} parent=5 // pred_check_branch
        %1404 = sbr.rel (%p1402) target = $region64
      $region63: #{tpu_custom_call.1} parent=5 // pred_region
        %s1405 = ssub.s32 %s18, 2
        // Predicated region
        $region65: #{tpu_custom_call.1} parent=63 // pred_check
          %p1406 = pneg %p283
        $region66: #{tpu_custom_call.1} parent=63 // pred_check_branch
          %1408 = sbr.rel (%p1406) target = $region68
        $region67: #{tpu_custom_call.1} parent=63 // pred_region
          %s1409 = sand.u32 %s268, 1
          %s1410 = scalar_lea.sflag [#allocation3], %s1409
          %s1411 = sand.u32 %s268, 1
          %s1412 = smul.addr %s1411, 8
          %s1413 = scalar_lea.vmem [#allocation2], %s1412
          %1415 = dma.done %s1410, 128
        $region68: #{tpu_custom_call.1} parent=63 // pred_fallthru
          _
      $region64: #{tpu_custom_call.1} parent=5 // pred_fallthru
        _
    $region6: #{tpu_custom_call.1} parent=1 // loop_footer
      %s22 = sadd.s32 1, %s18
    $region7: #{tpu_custom_call.1} parent=1 // loop_footer_branch
      %17 = sbr.rel target = $region3
    $region8: #{tpu_custom_call.1} parent=1 // loop_exit
      _
    %1416 = vsyncpa [#allocation3], 1
    %s1417 = scalar_lea.sflag [#allocation3], 1
    %1418 = vsyncpa %s1417, 1

</llo_original>
